<compile_context>
chip_gen: v5e
topology: v5e:2x2
jax: 0.10.0
libtpu: 0.0.40
codegen_flags: <defaults>
</compile_context>

<pallas_src>
import functools

import jax
import jax.numpy as jnp
from jax.experimental import pallas as pl
from jax.experimental.pallas import tpu as pltpu

BN_EPS = 1e-5
NORM_EPS = 1e-12

# K-tile cap. Sweepable per generation: ~2048 is enough on v5e (820 GB/s),
# 4096 is a safe middle, 8192 pays off on v7x (3.2 TB/s) and still fits VMEM.
MAX_K_TILE = 4096


def _round_up(x, m):
    return ((x + m - 1) // m) * m


def _padded_din(din):
    """Encoder reduction dim padded so it is a multiple of the chosen K tile."""
    d = _round_up(din, 128)
    if d > MAX_K_TILE:
        d = _round_up(din, MAX_K_TILE)
    return d


def _k_tile(din_pad):
    return min(din_pad, MAX_K_TILE)


def _mlp(x, w1, b1, g1, be1, w2, b2):
    """Linear -> BatchNorm1d (train-mode batch stats) -> ReLU -> Linear.

    Matmuls run in bf16 on the MXU with f32 accumulation; BN/ReLU are f32.
    BN uses the two-pass (centered) variance to avoid catastrophic cancellation.
    """
    h = jnp.dot(x.astype(jnp.bfloat16), w1,
                preferred_element_type=jnp.float32) + b1
    mean = jnp.mean(h, axis=0, keepdims=True)
    cent = h - mean
    var = jnp.mean(cent * cent, axis=0, keepdims=True)     # biased (PyTorch BN)
    h = cent * jax.lax.rsqrt(var + BN_EPS) * g1 + be1
    h = jnp.maximum(h, 0.0)
    return jnp.dot(h.astype(jnp.bfloat16), w2,
                   preferred_element_type=jnp.float32) + b2


def _l2norm(x):
    """F.normalize(x, dim=-1): x / max(||x||, eps), via EUP rsqrt."""
    ss = jnp.sum(x * x, axis=-1, keepdims=True)
    inv = jax.lax.rsqrt(jnp.maximum(ss, NORM_EPS * NORM_EPS))
    return x * inv


def byol_loss_kernel(
    # streamed K-tiles
    x_ref,        # (2B, tk)   bf16   flattened views, both batches
    ew_ref,       # (tk, 2F)   bf16   fused online|target encoder weights
    # resident small params
    eb_ref,       # (1, 2F)    f32    fused encoder bias
    hw_ref,       # (6, F, F)  bf16   [op_w1, op_w2, pr_w1, pr_w2, tp_w1, tp_w2]
    hv_ref,       # (16, F)    f32    rows: op[b1,g1,be1,b2], pr[...], tp[...], pad
    # output
    loss_ref,     # (1, 1)     f32    SMEM
    # scratch
    acc_ref,      # (2B, 2F)   f32    VMEM accumulator
    *, feat_dim, batch,
):
    k = pl.program_id(0)

    @pl.when(k == 0)
    def _init():
        acc_ref[...] = jnp.zeros_like(acc_ref)

    # fused online+target encoder matmul, K-tiled (bf16 MXU, f32 accumulate)
    acc_ref[...] += jnp.dot(x_ref[...], ew_ref[...],
                            preferred_element_type=jnp.float32)

    @pl.when(k == pl.num_programs(0) - 1)
    def _finalize():
        F = feat_dim
        repr_all = acc_ref[...] + eb_ref[...]          # (2B, 2F) f32
        repr_on = repr_all[:, :F]                      # lane-aligned halves
        repr_tg = repr_all[:, F:]

        hw = hw_ref[...]                               # (6, F, F) bf16
        hv = hv_ref[...]                               # (16, F)  f32

        def head(x, wi, vi):
            return _mlp(x, hw[wi], hv[vi], hv[vi + 1], hv[vi + 2],
                        hw[wi + 1], hv[vi + 3])

        proj_on = head(repr_on, 0, 0)    # online projector
        pred_on = head(proj_on, 2, 4)    # online predictor
        proj_tg = head(repr_tg, 4, 8)    # target projector (stop-grad branch)

        p = _l2norm(pred_on)                           # (2B, F) f32
        t = _l2norm(proj_tg)

        # Symmetric pairing: prediction row i pairs with target row
        # (i + B) mod 2B, done with an XLU sublane roll (free slot).
        t_paired = pltpu.roll(t, shift=batch, axis=0)
        row_dot = jnp.sum(p * t_paired, axis=-1, keepdims=True)   # (2B, 1)
        per_row = 2.0 - 2.0 * row_dot
        # reference: (loss_one + loss_two).mean() over B == sum over 2B rows / B
        loss_ref[0, 0] = jnp.sum(per_row) / batch


def byol_forward(view1, view2, params):
    """view1/view2: (B, C, H, W) NCHW float32.  Returns the scalar BYOL loss."""
    B = view1.shape[0]
    din = view1.shape[1] * view1.shape[2] * view1.shape[3]
    M = 2 * B

    enc_w = params["enc_w"]       # (Din_pad, 2F) bf16, pre-fused + pre-padded
    enc_b = params["enc_b"]       # (1, 2F) f32
    head_w = params["head_w"]     # (6, F, F) bf16
    head_v = params["head_v"]     # (16, F) f32

    din_pad, two_f = enc_w.shape
    F = two_f // 2
    tk = _k_tile(din_pad)
    assert din_pad % tk == 0
    kt = din_pad // tk

    # flatten both views and concatenate along the batch (BYOL's BN runs over
    # the concatenated 2B batch); cast to bf16 for the MXU.  Zero-padding the
    # K dim is exact because the encoder bias is added after accumulation.
    x = jnp.concatenate(
        [view1.reshape(B, din), view2.reshape(B, din)], axis=0
    ).astype(jnp.bfloat16)
    if din_pad != din:
        x = jnp.pad(x, ((0, 0), (0, din_pad - din)))

    in_specs = [
        pl.BlockSpec((M, tk), lambda k: (0, k)),          # x: stream K tiles
        pl.BlockSpec((tk, two_f), lambda k: (k, 0)),      # encoder weights: stream
        pl.BlockSpec((1, two_f), lambda k: (0, 0)),       # encoder bias: resident
        pl.BlockSpec((6, F, F), lambda k: (0, 0, 0)),     # packed head weights
        pl.BlockSpec((16, F), lambda k: (0, 0)),          # packed head vectors
    ]
    out_spec = pl.BlockSpec((1, 1), lambda k: (0, 0),
                            memory_space=pltpu.MemorySpace.SMEM)

    # rough cost estimate for the XLA scheduler
    flops = 2 * M * din_pad * two_f + 2 * M * 6 * F * F
    transcendentals = 3 * F + 2 * M
    bytes_accessed = (x.size * 2 + enc_w.size * 2 + enc_b.size * 4
                      + head_w.size * 2 + head_v.size * 4 + 4)

    kernel = functools.partial(byol_loss_kernel, feat_dim=F, batch=B)

    loss = pl.pallas_call(
        kernel,
        out_shape=jax.ShapeDtypeStruct((1, 1), jnp.float32),
        grid_spec=pltpu.PrefetchScalarGridSpec(
            num_scalar_prefetch=0,
            grid=(kt,),
            in_specs=in_specs,
            out_specs=out_spec,
            scratch_shapes=[pltpu.VMEM((M, two_f), jnp.float32)],
        ),
        compiler_params=pltpu.CompilerParams(
            dimension_semantics=("arbitrary",),            # Din is a reduction axis
            vmem_limit_bytes=32 * 1024 * 1024,             # safe on v5e/v6e/v7x
        ),
        cost_estimate=pl.CostEstimate(
            flops=int(flops),
            transcendentals=int(transcendentals),
            bytes_accessed=int(bytes_accessed),
        ),
    )(x, enc_w, enc_b, head_w, head_v)
    return loss[0, 0]


def init_params(key, din, feat_dim):
    """Synthetic BYOL weights stored directly in the kernel-ready layout.

      enc_w : (Din_pad, 2F) bf16   online|target encoder weights, fused + K-padded
      enc_b : (1, 2F)       f32    fused encoder bias
      head_w: (6, F, F)     bf16   [op_w1, op_w2, pr_w1, pr_w2, tp_w1, tp_w2]
      head_v: (16, F)       f32    rows: op[b1,g1,be1,b2], pr[...], tp[...], 4 pad rows

    Keeping this layout in the training state (the EMA update can emit it)
    avoids a per-step XLA concat/cast/pad pass over the big encoder weights.
    """
    F = feat_dim
    ks = jax.random.split(key, 5)

    def lin_w(k, fan_in, fan_out):
        return jax.random.normal(k, (fan_in, fan_out), jnp.float32) / jnp.sqrt(
            jnp.float32(fan_in))

    oe_w = lin_w(ks[0], din, F)                 # online encoder
    oe_b = jnp.zeros((1, F), jnp.float32)
    te_w, te_b = oe_w, oe_b                     # target = EMA copy at init

    din_pad = _padded_din(din)
    enc_w = jnp.concatenate([oe_w, te_w], axis=1)
    enc_w = jnp.pad(enc_w, ((0, din_pad - din), (0, 0))).astype(jnp.bfloat16)
    enc_b = jnp.concatenate([oe_b, te_b], axis=1).astype(jnp.float32)

    op_w1, op_w2 = lin_w(ks[1], F, F), lin_w(ks[2], F, F)   # online projector
    pr_w1, pr_w2 = lin_w(ks[3], F, F), lin_w(ks[4], F, F)   # online predictor
    tp_w1, tp_w2 = op_w1, op_w2                             # target projector (EMA copy)

    head_w = jnp.stack(
        [op_w1, op_w2, pr_w1, pr_w2, tp_w1, tp_w2]).astype(jnp.bfloat16)

    zeros = jnp.zeros((F,), jnp.float32)
    ones = jnp.ones((F,), jnp.float32)
    # per head: [b1, g1, be1, b2]; 4 zero pad rows to 16 (f32 sublane multiple)
    head_v = jnp.stack([zeros, ones, zeros, zeros] * 3 + [zeros] * 4)

    return dict(enc_w=enc_w, enc_b=enc_b, head_w=head_w, head_v=head_v)


if __name__ == "__main__":
    key = jax.random.PRNGKey(0)
    k_img, k_par = jax.random.split(key)

    # small shapes: batch=4 (so 2B=8 = one full sublane tile), channels=4, 16x16
    B, C, H, W = 4, 4, 16, 16
    FEAT = 128                               # lane-aligned repr/hidden/proj dim
    DIN = C * H * W                          # 1024 -> single K step (kt == 1)

    images = jax.random.normal(k_img, (B, C, H, W), jnp.float32)  # NCHW
    # deterministic stand-in "augmentations": identity + horizontal flip
    view1 = images
    view2 = images[:, :, :, ::-1]

    params = init_params(k_par, DIN, FEAT)

    loss = jax.jit(byol_forward)(view1, view2, params)
    jax.block_until_ready(loss)
    assert loss.shape == () and jnp.isfinite(loss)
    print("KERNEL_OK")
</pallas_src>

<mosaic_0001>
module attributes {stable_mosaic.version = 11 : i64} {
  func.func @byol_loss_kernel(%arg0: i32, %arg1: memref<8x1024xbf16, #tpu.memory_space<vmem>>, %arg2: memref<1024x256xbf16, #tpu.memory_space<vmem>>, %arg3: memref<1x256xf32, #tpu.memory_space<vmem>>, %arg4: memref<6x128x128xbf16, #tpu.memory_space<vmem>>, %arg5: memref<16x128xf32, #tpu.memory_space<vmem>>, %arg6: memref<1x1xf32, #tpu.memory_space<smem>>, %arg7: memref<8x256xf32, #tpu.memory_space<vmem>>) attributes {dimension_semantics = [#tpu.dimension_semantics<arbitrary>], iteration_bounds = array<i64: 1>, scalar_prefetch = 0 : i64, scratch_operands = 1 : i64, tpu.core_type = #tpu.core_type<tc>, window_params = [{transform_indices = @transform_0, window_bounds = array<i64: 8, 1024>}, {transform_indices = @transform_1, window_bounds = array<i64: 1024, 256>}, {pipeline_mode = #tpu.pipeline_mode<synchronous>, transform_indices = @transform_2, window_bounds = array<i64: 1, 256>}, {pipeline_mode = #tpu.pipeline_mode<synchronous>, transform_indices = @transform_3, window_bounds = array<i64: 6, 128, 128>}, {pipeline_mode = #tpu.pipeline_mode<synchronous>, transform_indices = @transform_4, window_bounds = array<i64: 16, 128>}, {transform_indices = @transform_5, window_bounds = array<i64: 1, 1>}]} {
    %c0_i32 = arith.constant 0 : i32
    %0 = arith.cmpi eq, %arg0, %c0_i32 : i32
    %1 = arith.extui %0 : i1 to i32
    %c0_i32_0 = arith.constant 0 : i32
    %2 = arith.cmpi ne, %1, %c0_i32_0 : i32
    scf.if %2 {
      %cst_10 = arith.constant 0.000000e+00 : f32
      %12 = vector.broadcast %cst_10 : f32 to vector<8x256xf32>
      %c0_11 = arith.constant 0 : index
      %c0_12 = arith.constant 0 : index
      %13 = vector.load %arg7[%c0_11, %c0_12] : memref<8x256xf32, #tpu.memory_space<vmem>>, vector<8x256xf32>
      tpu.vector_store %arg7[%c0_11, %c0_12], %12 {strides = array<i32>} : memref<8x256xf32, #tpu.memory_space<vmem>>, vector<8x256xf32>,
    } else {
    }
    %c0 = arith.constant 0 : index
    %c0_1 = arith.constant 0 : index
    %3 = vector.load %arg7[%c0, %c0_1] : memref<8x256xf32, #tpu.memory_space<vmem>>, vector<8x256xf32>
    %c0_2 = arith.constant 0 : index
    %c0_3 = arith.constant 0 : index
    %4 = vector.load %arg1[%c0_2, %c0_3] : memref<8x1024xbf16, #tpu.memory_space<vmem>>, vector<8x1024xbf16>
    %c0_4 = arith.constant 0 : index
    %c0_5 = arith.constant 0 : index
    %5 = vector.load %arg2[%c0_4, %c0_5] : memref<1024x256xbf16, #tpu.memory_space<vmem>>, vector<1024x256xbf16>
    %cst = arith.constant dense<0.000000e+00> : vector<8x256xf32>
    %6 = tpu.matmul %4, %5, %cst {dimension_numbers = #tpu.dot_dimension_numbers<[1], [0], [0], [1], [0, 0, 1, 1], [], []>} : vector<8x1024xbf16>, vector<1024x256xbf16>, vector<8x256xf32> -> vector<8x256xf32>
    %7 = arith.addf %3, %6 : vector<8x256xf32>
    %c0_6 = arith.constant 0 : index
    %c0_7 = arith.constant 0 : index
    %8 = vector.load %arg7[%c0_6, %c0_7] : memref<8x256xf32, #tpu.memory_space<vmem>>, vector<8x256xf32>
    tpu.vector_store %arg7[%c0_6, %c0_7], %7 {strides = array<i32>} : memref<8x256xf32, #tpu.memory_space<vmem>>, vector<8x256xf32>,
    %c0_i32_8 = arith.constant 0 : i32
    %9 = arith.cmpi eq, %arg0, %c0_i32_8 : i32
    %10 = arith.extui %9 : i1 to i32
    %c0_i32_9 = arith.constant 0 : i32
    %11 = arith.cmpi ne, %10, %c0_i32_9 : i32
    scf.if %11 {
      %c0_10 = arith.constant 0 : index
      %c0_11 = arith.constant 0 : index
      %12 = vector.load %arg7[%c0_10, %c0_11] : memref<8x256xf32, #tpu.memory_space<vmem>>, vector<8x256xf32>
      %c0_12 = arith.constant 0 : index
      %c0_13 = arith.constant 0 : index
      %13 = vector.load %arg3[%c0_12, %c0_13] : memref<1x256xf32, #tpu.memory_space<vmem>>, vector<1x256xf32>
      %14 = vector.broadcast %13 : vector<1x256xf32> to vector<8x256xf32>
      %15 = arith.addf %12, %14 : vector<8x256xf32>
      %16 = vector.extract_strided_slice %15 {offsets = [0, 0], sizes = [8, 128], strides = [1, 1]} : vector<8x256xf32> to vector<8x128xf32>
      %17 = vector.extract_strided_slice %15 {offsets = [0, 128], sizes = [8, 128], strides = [1, 1]} : vector<8x256xf32> to vector<8x128xf32>
      %c0_14 = arith.constant 0 : index
      %c0_15 = arith.constant 0 : index
      %c0_16 = arith.constant 0 : index
      %18 = vector.load %arg4[%c0_14, %c0_15, %c0_16] : memref<6x128x128xbf16, #tpu.memory_space<vmem>>, vector<6x128x128xbf16>
      %c0_17 = arith.constant 0 : index
      %c0_18 = arith.constant 0 : index
      %19 = vector.load %arg5[%c0_17, %c0_18] : memref<16x128xf32, #tpu.memory_space<vmem>>, vector<16x128xf32>
      %20 = vector.extract_strided_slice %18 {offsets = [0, 0, 0], sizes = [1, 128, 128], strides = [1, 1, 1]} : vector<6x128x128xbf16> to vector<1x128x128xbf16>
      %21 = vector.shape_cast %20 : vector<1x128x128xbf16> to vector<128x128xbf16>
      %22 = vector.extract_strided_slice %19 {offsets = [0, 0], sizes = [1, 128], strides = [1, 1]} : vector<16x128xf32> to vector<1x128xf32>
      %23 = vector.shape_cast %22 : vector<1x128xf32> to vector<128xf32>
      %24 = vector.extract_strided_slice %19 {offsets = [1, 0], sizes = [1, 128], strides = [1, 1]} : vector<16x128xf32> to vector<1x128xf32>
      %25 = vector.shape_cast %24 : vector<1x128xf32> to vector<128xf32>
      %26 = vector.extract_strided_slice %19 {offsets = [2, 0], sizes = [1, 128], strides = [1, 1]} : vector<16x128xf32> to vector<1x128xf32>
      %27 = vector.shape_cast %26 : vector<1x128xf32> to vector<128xf32>
      %28 = vector.extract_strided_slice %18 {offsets = [1, 0, 0], sizes = [1, 128, 128], strides = [1, 1, 1]} : vector<6x128x128xbf16> to vector<1x128x128xbf16>
      %29 = vector.shape_cast %28 : vector<1x128x128xbf16> to vector<128x128xbf16>
      %30 = vector.extract_strided_slice %19 {offsets = [3, 0], sizes = [1, 128], strides = [1, 1]} : vector<16x128xf32> to vector<1x128xf32>
      %31 = vector.shape_cast %30 : vector<1x128xf32> to vector<128xf32>
      %32 = arith.truncf %16 : vector<8x128xf32> to vector<8x128xbf16>
      %cst_19 = arith.constant dense<0.000000e+00> : vector<8x128xf32>
      %33 = tpu.matmul %32, %21, %cst_19 {dimension_numbers = #tpu.dot_dimension_numbers<[1], [0], [0], [1], [0, 0, 1, 1], [], []>} : vector<8x128xbf16>, vector<128x128xbf16>, vector<8x128xf32> -> vector<8x128xf32>
      %34 = vector.shape_cast %23 : vector<128xf32> to vector<1x128xf32>
      %35 = vector.broadcast %34 : vector<1x128xf32> to vector<8x128xf32>
      %36 = arith.addf %33, %35 : vector<8x128xf32>
      %cst_20 = arith.constant dense<0.000000e+00> : vector<128xf32>
      %37 = vector.multi_reduction <add>, %36, %cst_20 [0] : vector<8x128xf32> to vector<128xf32>
      %38 = vector.shape_cast %37 : vector<128xf32> to vector<1x128xf32>
      %cst_21 = arith.constant 8.000000e+00 : f32
      %39 = vector.broadcast %cst_21 : f32 to vector<1x128xf32>
      %40 = arith.divf %38, %39 : vector<1x128xf32>
      %41 = vector.broadcast %40 : vector<1x128xf32> to vector<8x128xf32>
      %42 = arith.subf %36, %41 : vector<8x128xf32>
      %43 = arith.mulf %42, %42 : vector<8x128xf32>
      %cst_22 = arith.constant dense<0.000000e+00> : vector<128xf32>
      %44 = vector.multi_reduction <add>, %43, %cst_22 [0] : vector<8x128xf32> to vector<128xf32>
      %45 = vector.shape_cast %44 : vector<128xf32> to vector<1x128xf32>
      %cst_23 = arith.constant 8.000000e+00 : f32
      %46 = vector.broadcast %cst_23 : f32 to vector<1x128xf32>
      %47 = arith.divf %45, %46 : vector<1x128xf32>
      %cst_24 = arith.constant 9.99999974E-6 : f32
      %48 = vector.broadcast %cst_24 : f32 to vector<1x128xf32>
      %49 = arith.addf %47, %48 : vector<1x128xf32>
      %50 = math.rsqrt %49 : vector<1x128xf32>
      %51 = vector.broadcast %50 : vector<1x128xf32> to vector<8x128xf32>
      %52 = arith.mulf %42, %51 : vector<8x128xf32>
      %53 = vector.shape_cast %25 : vector<128xf32> to vector<1x128xf32>
      %54 = vector.broadcast %53 : vector<1x128xf32> to vector<8x128xf32>
      %55 = arith.mulf %52, %54 : vector<8x128xf32>
      %56 = vector.shape_cast %27 : vector<128xf32> to vector<1x128xf32>
      %57 = vector.broadcast %56 : vector<1x128xf32> to vector<8x128xf32>
      %58 = arith.addf %55, %57 : vector<8x128xf32>
      %cst_25 = arith.constant 0.000000e+00 : f32
      %59 = vector.broadcast %cst_25 : f32 to vector<8x128xf32>
      %60 = arith.maximumf %58, %59 : vector<8x128xf32>
      %61 = arith.truncf %60 : vector<8x128xf32> to vector<8x128xbf16>
      %cst_26 = arith.constant dense<0.000000e+00> : vector<8x128xf32>
      %62 = tpu.matmul %61, %29, %cst_26 {dimension_numbers = #tpu.dot_dimension_numbers<[1], [0], [0], [1], [0, 0, 1, 1], [], []>} : vector<8x128xbf16>, vector<128x128xbf16>, vector<8x128xf32> -> vector<8x128xf32>
      %63 = vector.shape_cast %31 : vector<128xf32> to vector<1x128xf32>
      %64 = vector.broadcast %63 : vector<1x128xf32> to vector<8x128xf32>
      %65 = arith.addf %62, %64 : vector<8x128xf32>
      %66 = vector.extract_strided_slice %18 {offsets = [2, 0, 0], sizes = [1, 128, 128], strides = [1, 1, 1]} : vector<6x128x128xbf16> to vector<1x128x128xbf16>
      %67 = vector.shape_cast %66 : vector<1x128x128xbf16> to vector<128x128xbf16>
      %68 = vector.extract_strided_slice %19 {offsets = [4, 0], sizes = [1, 128], strides = [1, 1]} : vector<16x128xf32> to vector<1x128xf32>
      %69 = vector.shape_cast %68 : vector<1x128xf32> to vector<128xf32>
      %70 = vector.extract_strided_slice %19 {offsets = [5, 0], sizes = [1, 128], strides = [1, 1]} : vector<16x128xf32> to vector<1x128xf32>
      %71 = vector.shape_cast %70 : vector<1x128xf32> to vector<128xf32>
      %72 = vector.extract_strided_slice %19 {offsets = [6, 0], sizes = [1, 128], strides = [1, 1]} : vector<16x128xf32> to vector<1x128xf32>
      %73 = vector.shape_cast %72 : vector<1x128xf32> to vector<128xf32>
      %74 = vector.extract_strided_slice %18 {offsets = [3, 0, 0], sizes = [1, 128, 128], strides = [1, 1, 1]} : vector<6x128x128xbf16> to vector<1x128x128xbf16>
      %75 = vector.shape_cast %74 : vector<1x128x128xbf16> to vector<128x128xbf16>
      %76 = vector.extract_strided_slice %19 {offsets = [7, 0], sizes = [1, 128], strides = [1, 1]} : vector<16x128xf32> to vector<1x128xf32>
      %77 = vector.shape_cast %76 : vector<1x128xf32> to vector<128xf32>
      %78 = arith.truncf %65 : vector<8x128xf32> to vector<8x128xbf16>
      %cst_27 = arith.constant dense<0.000000e+00> : vector<8x128xf32>
      %79 = tpu.matmul %78, %67, %cst_27 {dimension_numbers = #tpu.dot_dimension_numbers<[1], [0], [0], [1], [0, 0, 1, 1], [], []>} : vector<8x128xbf16>, vector<128x128xbf16>, vector<8x128xf32> -> vector<8x128xf32>
      %80 = vector.shape_cast %69 : vector<128xf32> to vector<1x128xf32>
      %81 = vector.broadcast %80 : vector<1x128xf32> to vector<8x128xf32>
      %82 = arith.addf %79, %81 : vector<8x128xf32>
      %cst_28 = arith.constant dense<0.000000e+00> : vector<128xf32>
      %83 = vector.multi_reduction <add>, %82, %cst_28 [0] : vector<8x128xf32> to vector<128xf32>
      %84 = vector.shape_cast %83 : vector<128xf32> to vector<1x128xf32>
      %cst_29 = arith.constant 8.000000e+00 : f32
      %85 = vector.broadcast %cst_29 : f32 to vector<1x128xf32>
      %86 = arith.divf %84, %85 : vector<1x128xf32>
      %87 = vector.broadcast %86 : vector<1x128xf32> to vector<8x128xf32>
      %88 = arith.subf %82, %87 : vector<8x128xf32>
      %89 = arith.mulf %88, %88 : vector<8x128xf32>
      %cst_30 = arith.constant dense<0.000000e+00> : vector<128xf32>
      %90 = vector.multi_reduction <add>, %89, %cst_30 [0] : vector<8x128xf32> to vector<128xf32>
      %91 = vector.shape_cast %90 : vector<128xf32> to vector<1x128xf32>
      %cst_31 = arith.constant 8.000000e+00 : f32
      %92 = vector.broadcast %cst_31 : f32 to vector<1x128xf32>
      %93 = arith.divf %91, %92 : vector<1x128xf32>
      %cst_32 = arith.constant 9.99999974E-6 : f32
      %94 = vector.broadcast %cst_32 : f32 to vector<1x128xf32>
      %95 = arith.addf %93, %94 : vector<1x128xf32>
      %96 = math.rsqrt %95 : vector<1x128xf32>
      %97 = vector.broadcast %96 : vector<1x128xf32> to vector<8x128xf32>
      %98 = arith.mulf %88, %97 : vector<8x128xf32>
      %99 = vector.shape_cast %71 : vector<128xf32> to vector<1x128xf32>
      %100 = vector.broadcast %99 : vector<1x128xf32> to vector<8x128xf32>
      %101 = arith.mulf %98, %100 : vector<8x128xf32>
      %102 = vector.shape_cast %73 : vector<128xf32> to vector<1x128xf32>
      %103 = vector.broadcast %102 : vector<1x128xf32> to vector<8x128xf32>
      %104 = arith.addf %101, %103 : vector<8x128xf32>
      %cst_33 = arith.constant 0.000000e+00 : f32
      %105 = vector.broadcast %cst_33 : f32 to vector<8x128xf32>
      %106 = arith.maximumf %104, %105 : vector<8x128xf32>
      %107 = arith.truncf %106 : vector<8x128xf32> to vector<8x128xbf16>
      %cst_34 = arith.constant dense<0.000000e+00> : vector<8x128xf32>
      %108 = tpu.matmul %107, %75, %cst_34 {dimension_numbers = #tpu.dot_dimension_numbers<[1], [0], [0], [1], [0, 0, 1, 1], [], []>} : vector<8x128xbf16>, vector<128x128xbf16>, vector<8x128xf32> -> vector<8x128xf32>
      %109 = vector.shape_cast %77 : vector<128xf32> to vector<1x128xf32>
      %110 = vector.broadcast %109 : vector<1x128xf32> to vector<8x128xf32>
      %111 = arith.addf %108, %110 : vector<8x128xf32>
      %112 = vector.extract_strided_slice %18 {offsets = [4, 0, 0], sizes = [1, 128, 128], strides = [1, 1, 1]} : vector<6x128x128xbf16> to vector<1x128x128xbf16>
      %113 = vector.shape_cast %112 : vector<1x128x128xbf16> to vector<128x128xbf16>
      %114 = vector.extract_strided_slice %19 {offsets = [8, 0], sizes = [1, 128], strides = [1, 1]} : vector<16x128xf32> to vector<1x128xf32>
      %115 = vector.shape_cast %114 : vector<1x128xf32> to vector<128xf32>
      %116 = vector.extract_strided_slice %19 {offsets = [9, 0], sizes = [1, 128], strides = [1, 1]} : vector<16x128xf32> to vector<1x128xf32>
      %117 = vector.shape_cast %116 : vector<1x128xf32> to vector<128xf32>
      %118 = vector.extract_strided_slice %19 {offsets = [10, 0], sizes = [1, 128], strides = [1, 1]} : vector<16x128xf32> to vector<1x128xf32>
      %119 = vector.shape_cast %118 : vector<1x128xf32> to vector<128xf32>
      %120 = vector.extract_strided_slice %18 {offsets = [5, 0, 0], sizes = [1, 128, 128], strides = [1, 1, 1]} : vector<6x128x128xbf16> to vector<1x128x128xbf16>
      %121 = vector.shape_cast %120 : vector<1x128x128xbf16> to vector<128x128xbf16>
      %122 = vector.extract_strided_slice %19 {offsets = [11, 0], sizes = [1, 128], strides = [1, 1]} : vector<16x128xf32> to vector<1x128xf32>
      %123 = vector.shape_cast %122 : vector<1x128xf32> to vector<128xf32>
      %124 = arith.truncf %17 : vector<8x128xf32> to vector<8x128xbf16>
      %cst_35 = arith.constant dense<0.000000e+00> : vector<8x128xf32>
      %125 = tpu.matmul %124, %113, %cst_35 {dimension_numbers = #tpu.dot_dimension_numbers<[1], [0], [0], [1], [0, 0, 1, 1], [], []>} : vector<8x128xbf16>, vector<128x128xbf16>, vector<8x128xf32> -> vector<8x128xf32>
      %126 = vector.shape_cast %115 : vector<128xf32> to vector<1x128xf32>
      %127 = vector.broadcast %126 : vector<1x128xf32> to vector<8x128xf32>
      %128 = arith.addf %125, %127 : vector<8x128xf32>
      %cst_36 = arith.constant dense<0.000000e+00> : vector<128xf32>
      %129 = vector.multi_reduction <add>, %128, %cst_36 [0] : vector<8x128xf32> to vector<128xf32>
      %130 = vector.shape_cast %129 : vector<128xf32> to vector<1x128xf32>
      %cst_37 = arith.constant 8.000000e+00 : f32
      %131 = vector.broadcast %cst_37 : f32 to vector<1x128xf32>
      %132 = arith.divf %130, %131 : vector<1x128xf32>
      %133 = vector.broadcast %132 : vector<1x128xf32> to vector<8x128xf32>
      %134 = arith.subf %128, %133 : vector<8x128xf32>
      %135 = arith.mulf %134, %134 : vector<8x128xf32>
      %cst_38 = arith.constant dense<0.000000e+00> : vector<128xf32>
      %136 = vector.multi_reduction <add>, %135, %cst_38 [0] : vector<8x128xf32> to vector<128xf32>
      %137 = vector.shape_cast %136 : vector<128xf32> to vector<1x128xf32>
      %cst_39 = arith.constant 8.000000e+00 : f32
      %138 = vector.broadcast %cst_39 : f32 to vector<1x128xf32>
      %139 = arith.divf %137, %138 : vector<1x128xf32>
      %cst_40 = arith.constant 9.99999974E-6 : f32
      %140 = vector.broadcast %cst_40 : f32 to vector<1x128xf32>
      %141 = arith.addf %139, %140 : vector<1x128xf32>
      %142 = math.rsqrt %141 : vector<1x128xf32>
      %143 = vector.broadcast %142 : vector<1x128xf32> to vector<8x128xf32>
      %144 = arith.mulf %134, %143 : vector<8x128xf32>
      %145 = vector.shape_cast %117 : vector<128xf32> to vector<1x128xf32>
      %146 = vector.broadcast %145 : vector<1x128xf32> to vector<8x128xf32>
      %147 = arith.mulf %144, %146 : vector<8x128xf32>
      %148 = vector.shape_cast %119 : vector<128xf32> to vector<1x128xf32>
      %149 = vector.broadcast %148 : vector<1x128xf32> to vector<8x128xf32>
      %150 = arith.addf %147, %149 : vector<8x128xf32>
      %cst_41 = arith.constant 0.000000e+00 : f32
      %151 = vector.broadcast %cst_41 : f32 to vector<8x128xf32>
      %152 = arith.maximumf %150, %151 : vector<8x128xf32>
      %153 = arith.truncf %152 : vector<8x128xf32> to vector<8x128xbf16>
      %cst_42 = arith.constant dense<0.000000e+00> : vector<8x128xf32>
      %154 = tpu.matmul %153, %121, %cst_42 {dimension_numbers = #tpu.dot_dimension_numbers<[1], [0], [0], [1], [0, 0, 1, 1], [], []>} : vector<8x128xbf16>, vector<128x128xbf16>, vector<8x128xf32> -> vector<8x128xf32>
      %155 = vector.shape_cast %123 : vector<128xf32> to vector<1x128xf32>
      %156 = vector.broadcast %155 : vector<1x128xf32> to vector<8x128xf32>
      %157 = arith.addf %154, %156 : vector<8x128xf32>
      %158 = arith.mulf %111, %111 : vector<8x128xf32>
      %cst_43 = arith.constant dense<0.000000e+00> : vector<8xf32>
      %159 = vector.multi_reduction <add>, %158, %cst_43 [1] : vector<8x128xf32> to vector<8xf32>
      %160 = vector.shape_cast %159 : vector<8xf32> to vector<8x1xf32>
      %cst_44 = arith.constant 1.000000e-24 : f32
      %161 = vector.broadcast %cst_44 : f32 to vector<8x1xf32>
      %162 = arith.maximumf %160, %161 : vector<8x1xf32>
      %163 = math.rsqrt %162 : vector<8x1xf32>
      %164 = vector.broadcast %163 : vector<8x1xf32> to vector<8x128xf32>
      %165 = arith.mulf %111, %164 : vector<8x128xf32>
      %166 = arith.mulf %157, %157 : vector<8x128xf32>
      %cst_45 = arith.constant dense<0.000000e+00> : vector<8xf32>
      %167 = vector.multi_reduction <add>, %166, %cst_45 [1] : vector<8x128xf32> to vector<8xf32>
      %168 = vector.shape_cast %167 : vector<8xf32> to vector<8x1xf32>
      %cst_46 = arith.constant 1.000000e-24 : f32
      %169 = vector.broadcast %cst_46 : f32 to vector<8x1xf32>
      %170 = arith.maximumf %168, %169 : vector<8x1xf32>
      %171 = math.rsqrt %170 : vector<8x1xf32>
      %172 = vector.broadcast %171 : vector<8x1xf32> to vector<8x128xf32>
      %173 = arith.mulf %157, %172 : vector<8x128xf32>
      %c4_i32 = arith.constant 4 : i32
      %174 = tpu.dynamic_rotate %173 by %c4_i32 dim 0 : vector<8x128xf32>, i32 -> vector<8x128xf32>
      %175 = arith.mulf %165, %174 : vector<8x128xf32>
      %cst_47 = arith.constant dense<0.000000e+00> : vector<8xf32>
      %176 = vector.multi_reduction <add>, %175, %cst_47 [1] : vector<8x128xf32> to vector<8xf32>
      %177 = vector.shape_cast %176 : vector<8xf32> to vector<8x1xf32>
      %cst_48 = arith.constant 2.000000e+00 : f32
      %178 = vector.broadcast %cst_48 : f32 to vector<8x1xf32>
      %179 = arith.mulf %178, %177 : vector<8x1xf32>
      %cst_49 = arith.constant 2.000000e+00 : f32
      %180 = vector.broadcast %cst_49 : f32 to vector<8x1xf32>
      %181 = arith.subf %180, %179 : vector<8x1xf32>
      %182 = vector.shape_cast %181 : vector<8x1xf32> to vector<1x8x1xf32>
      %cst_50 = arith.constant dense<0.000000e+00> : vector<1xf32>
      %183 = vector.multi_reduction <add>, %182, %cst_50 [1, 2] : vector<1x8x1xf32> to vector<1xf32>
      %184 = vector.shape_cast %183 : vector<1xf32> to vector<1x1x1xf32>
      %185 = vector.extract %184[0, 0, 0] : f32 from vector<1x1x1xf32>
      %cst_51 = arith.constant 4.000000e+00 : f32
      %186 = arith.divf %185, %cst_51 : f32
      %c0_52 = arith.constant 0 : index
      %c0_53 = arith.constant 0 : index
      %187 = memref.load %arg6[%c0_52, %c0_53] : memref<1x1xf32, #tpu.memory_space<smem>>
      memref.store %186, %arg6[%c0_52, %c0_53] : memref<1x1xf32, #tpu.memory_space<smem>>
    } else {
    }
    return
  }
  func.func @transform_0(%arg0: i32) -> (i32, i32) {
    %c0_i32 = arith.constant 0 : i32
    %c0_i32_0 = arith.constant 0 : i32
    return %c0_i32, %arg0 : i32, i32
  }
  func.func @transform_1(%arg0: i32) -> (i32, i32) {
    %c0_i32 = arith.constant 0 : i32
    %c0_i32_0 = arith.constant 0 : i32
    return %arg0, %c0_i32 : i32, i32
  }
  func.func @transform_2(%arg0: i32) -> (i32, i32) {
    %c0_i32 = arith.constant 0 : i32
    %c0_i32_0 = arith.constant 0 : i32
    %c0_i32_1 = arith.constant 0 : i32
    return %c0_i32, %c0_i32_0 : i32, i32
  }
  func.func @transform_3(%arg0: i32) -> (i32, i32, i32) {
    %c0_i32 = arith.constant 0 : i32
    %c0_i32_0 = arith.constant 0 : i32
    %c0_i32_1 = arith.constant 0 : i32
    %c0_i32_2 = arith.constant 0 : i32
    return %c0_i32, %c0_i32_0, %c0_i32_1 : i32, i32, i32
  }
  func.func @transform_4(%arg0: i32) -> (i32, i32) {
    %c0_i32 = arith.constant 0 : i32
    %c0_i32_0 = arith.constant 0 : i32
    %c0_i32_1 = arith.constant 0 : i32
    return %c0_i32, %c0_i32_0 : i32, i32
  }
  func.func @transform_5(%arg0: i32) -> (i32, i32) {
    %c0_i32 = arith.constant 0 : i32
    %c0_i32_0 = arith.constant 0 : i32
    %c0_i32_1 = arith.constant 0 : i32
    return %c0_i32, %c0_i32_0 : i32, i32
  }
}

</mosaic_0001>

<llo_original>
// kernel: byol_forward.1
$region0: #{byol_forward.1}
  #allocation0 [shape = 'u32[]', space=smem, size = 0x4, offset = 0x4, fixed_abs, tag = 'smem constant byte address 0x4 - core index']
  #allocation1 [shape = 'u32[72,128]{1,0:T(1,128)}', space=vmem, size = 0x9000, scoped, tag = 'internal scratch']
  #allocation2 [shape = 'f32[8,256]{1,0:T(8,128)}', space=vmem, size = 0x2000, scoped, tag = 'scratch operand']
  %s0 = inlined_call_operand.vmem [shape: bf16[8,1024], index: 0, kind: input, shape index: {}]
  %s1 = inlined_call_operand.vmem [shape: bf16[1024,256], index: 1, kind: input, shape index: {}]
  %s2 = inlined_call_operand.vmem [shape: f32[1,256], index: 2, kind: input, shape index: {}]
  %s3 = inlined_call_operand.hbm [shape: bf16[6,128,128], index: 3, kind: input, shape index: {}]
  %s4 = inlined_call_operand.vmem [shape: f32[16,128], index: 4, kind: input, shape index: {}]
  %s5 = inlined_call_operand.hbm [shape: f32[1,1], index: 5, kind: output, shape index: {}]
  %s6 = sld [smem:[#allocation0]]
  $region42: #{byol_forward.1} parent=0
    _
  %s8 = ssub.s32 1, %s6
  %s9 = scalar_select 0, %s8, %s6
  $region1: #{byol_forward.1} parent=0
    #allocation3 [shape = 'u8[196608]{0}', space=vmem, size = 0x30000, scoped, tag = 'input window, operand 3, single buffered']
    #allocation4 [shape = 's32[1]{0}', space=sflag, size = 0x4, scoped, tag = 'scoped memory for byol_forward.1']
    #allocation5 [shape = 's32[1]{0}', space=sflag, size = 0x4, scoped, tag = 'scoped memory for byol_forward.1']
    #allocation6 [shape = 'u8[512]{0}', space=smem, size = 0x200, scoped, tag = 'output window, operand 0, single buffered']
    %10 = vsyncpa [#allocation4], 0
    %11 = vsyncpa [#allocation5], 0
    // Predicated region
    $region2: #{byol_forward.1} parent=1 // pred_check
      _
    $region3: #{byol_forward.1} parent=1 // pred_check_branch
      %13 = sbr.rel (0) target = $region5
    $region4: #{byol_forward.1} parent=1 // pred_region
      _
    $region5: #{byol_forward.1} parent=1 // pred_fallthru
      _
    // Predicated region
    $region6: #{byol_forward.1} parent=1 // pred_check
      _
    $region7: #{byol_forward.1} parent=1 // pred_check_branch
      %15 = sbr.rel (0) target = $region9
    $region8: #{byol_forward.1} parent=1 // pred_region
      _
    $region9: #{byol_forward.1} parent=1 // pred_fallthru
      _
    // Predicated region
    $region10: #{byol_forward.1} parent=1 // pred_check
      _
    $region11: #{byol_forward.1} parent=1 // pred_check_branch
      %17 = sbr.rel (0) target = $region13
    $region12: #{byol_forward.1} parent=1 // pred_region
      _
    $region13: #{byol_forward.1} parent=1 // pred_fallthru
      _
    // Predicated region
    $region14: #{byol_forward.1} parent=1 // pred_check
      _
    $region15: #{byol_forward.1} parent=1 // pred_check_branch
      %19 = sbr.rel (0) target = $region17
    $region16: #{byol_forward.1} parent=1 // pred_region
      %21 = vsyncadd [#allocation4], 0
      %s22 = sshll.u32 %s3, 4
      %s23 = int_to_ptr.hbm [resolvable:$true] %s22
      %s24 = sshll.u32 [#allocation3], 4
      %s25 = int_to_ptr.vmem [resolvable:$true] %s24
      %30 = dma.hbm_to_vmem [thread:$0]  %s23, 6144, %s25, [#allocation4], 64, 64, 4
    $region17: #{byol_forward.1} parent=1 // pred_fallthru
      _
    // Predicated region
    $region18: #{byol_forward.1} parent=1 // pred_check
      _
    $region19: #{byol_forward.1} parent=1 // pred_check_branch
      %32 = sbr.rel (0) target = $region21
    $region20: #{byol_forward.1} parent=1 // pred_region
      _
    $region21: #{byol_forward.1} parent=1 // pred_fallthru
      _
    // Predicated region
    $region22: #{byol_forward.1} parent=1 // pred_check
      _
    $region23: #{byol_forward.1} parent=1 // pred_check_branch
      %34 = sbr.rel (0) target = $region25
    $region24: #{byol_forward.1} parent=1 // pred_region
      %36 = dma.done [#allocation4], 6144
    $region25: #{byol_forward.1} parent=1 // pred_fallthru
      _
    %p37 = scmp.eq.s32.totalorder 0, 0
    // Predicated region
    $region26: #{byol_forward.1} parent=1 // pred_check
      %p38 = pneg %p37
    $region27: #{byol_forward.1} parent=1 // pred_check_branch
      %40 = sbr.rel (%p38) target = $region29
    $region28: #{byol_forward.1} parent=1 // pred_region
      %41 = vst [vmem:[#allocation2] sm:$0xff] 0.0
      %42 = vst [vmem:[#allocation2 + $0x8] sm:$0xff] 0.0
    $region29: #{byol_forward.1} parent=1 // pred_fallthru
      _
    %v43 = vld [vmem:[#allocation2] sm:$0xff]
    %v44 = vld [vmem:[#allocation2 + $0x8] sm:$0xff]
    %v45 = vld [vmem:[%s0] sm:$0xff]
    %v46 = vld [vmem:[%s0 + $0x8] sm:$0xff]
    %v47 = vld [vmem:[%s0 + $0x10] sm:$0xff]
    %v48 = vld [vmem:[%s0 + $0x18] sm:$0xff]
    %v49 = vld [vmem:[%s1] sm:$0xff]
    %v50 = vld [vmem:[%s1 + $0x8] sm:$0xff]
    %v51 = vld [vmem:[%s1 + $0x10] sm:$0xff]
    %v52 = vld [vmem:[%s1 + $0x18] sm:$0xff]
    %v53 = vld [vmem:[%s1 + $0x20] sm:$0xff]
    %v54 = vld [vmem:[%s1 + $0x28] sm:$0xff]
    %v55 = vld [vmem:[%s1 + $0x30] sm:$0xff]
    %v56 = vld [vmem:[%s1 + $0x38] sm:$0xff]
    %v57 = vld [vmem:[%s1 + $0x40] sm:$0xff]
    %v58 = vld [vmem:[%s1 + $0x48] sm:$0xff]
    %v59 = vld [vmem:[%s1 + $0x50] sm:$0xff]
    %v60 = vld [vmem:[%s1 + $0x58] sm:$0xff]
    %v61 = vld [vmem:[%s1 + $0x60] sm:$0xff]
    %v62 = vld [vmem:[%s1 + $0x68] sm:$0xff]
    %v63 = vld [vmem:[%s1 + $0x70] sm:$0xff]
    %v64 = vld [vmem:[%s1 + $0x78] sm:$0xff]
    %v65 = vld [vmem:[%s1 + $0x80] sm:$0xff]
    %v66 = vld [vmem:[%s1 + $0x88] sm:$0xff]
    %v67 = vld [vmem:[%s1 + $0x90] sm:$0xff]
    %v68 = vld [vmem:[%s1 + $0x98] sm:$0xff]
    %v69 = vld [vmem:[%s1 + $0xa0] sm:$0xff]
    %v70 = vld [vmem:[%s1 + $0xa8] sm:$0xff]
    %v71 = vld [vmem:[%s1 + $0xb0] sm:$0xff]
    %v72 = vld [vmem:[%s1 + $0xb8] sm:$0xff]
    %v73 = vld [vmem:[%s1 + $0xc0] sm:$0xff]
    %v74 = vld [vmem:[%s1 + $0xc8] sm:$0xff]
    %v75 = vld [vmem:[%s1 + $0xd0] sm:$0xff]
    %v76 = vld [vmem:[%s1 + $0xd8] sm:$0xff]
    %v77 = vld [vmem:[%s1 + $0xe0] sm:$0xff]
    %v78 = vld [vmem:[%s1 + $0xe8] sm:$0xff]
    %v79 = vld [vmem:[%s1 + $0xf0] sm:$0xff]
    %v80 = vld [vmem:[%s1 + $0xf8] sm:$0xff]
    %v81 = vld [vmem:[%s1 + $0x100] sm:$0xff]
    %v82 = vld [vmem:[%s1 + $0x108] sm:$0xff]
    %v83 = vld [vmem:[%s1 + $0x110] sm:$0xff]
    %v84 = vld [vmem:[%s1 + $0x118] sm:$0xff]
    %v85 = vld [vmem:[%s1 + $0x120] sm:$0xff]
    %v86 = vld [vmem:[%s1 + $0x128] sm:$0xff]
    %v87 = vld [vmem:[%s1 + $0x130] sm:$0xff]
    %v88 = vld [vmem:[%s1 + $0x138] sm:$0xff]
    %v89 = vld [vmem:[%s1 + $0x140] sm:$0xff]
    %v90 = vld [vmem:[%s1 + $0x148] sm:$0xff]
    %v91 = vld [vmem:[%s1 + $0x150] sm:$0xff]
    %v92 = vld [vmem:[%s1 + $0x158] sm:$0xff]
    %v93 = vld [vmem:[%s1 + $0x160] sm:$0xff]
    %v94 = vld [vmem:[%s1 + $0x168] sm:$0xff]
    %v95 = vld [vmem:[%s1 + $0x170] sm:$0xff]
    %v96 = vld [vmem:[%s1 + $0x178] sm:$0xff]
    %v97 = vld [vmem:[%s1 + $0x180] sm:$0xff]
    %v98 = vld [vmem:[%s1 + $0x188] sm:$0xff]
    %v99 = vld [vmem:[%s1 + $0x190] sm:$0xff]
    %v100 = vld [vmem:[%s1 + $0x198] sm:$0xff]
    %v101 = vld [vmem:[%s1 + $0x1a0] sm:$0xff]
    %v102 = vld [vmem:[%s1 + $0x1a8] sm:$0xff]
    %v103 = vld [vmem:[%s1 + $0x1b0] sm:$0xff]
    %v104 = vld [vmem:[%s1 + $0x1b8] sm:$0xff]
    %v105 = vld [vmem:[%s1 + $0x1c0] sm:$0xff]
    %v106 = vld [vmem:[%s1 + $0x1c8] sm:$0xff]
    %v107 = vld [vmem:[%s1 + $0x1d0] sm:$0xff]
    %v108 = vld [vmem:[%s1 + $0x1d8] sm:$0xff]
    %v109 = vld [vmem:[%s1 + $0x1e0] sm:$0xff]
    %v110 = vld [vmem:[%s1 + $0x1e8] sm:$0xff]
    %v111 = vld [vmem:[%s1 + $0x1f0] sm:$0xff]
    %v112 = vld [vmem:[%s1 + $0x1f8] sm:$0xff]
    %v113 = vld [vmem:[%s1 + $0x200] sm:$0xff]
    %v114 = vld [vmem:[%s1 + $0x208] sm:$0xff]
    %v115 = vld [vmem:[%s1 + $0x210] sm:$0xff]
    %v116 = vld [vmem:[%s1 + $0x218] sm:$0xff]
    %v117 = vld [vmem:[%s1 + $0x220] sm:$0xff]
    %v118 = vld [vmem:[%s1 + $0x228] sm:$0xff]
    %v119 = vld [vmem:[%s1 + $0x230] sm:$0xff]
    %v120 = vld [vmem:[%s1 + $0x238] sm:$0xff]
    %v121 = vld [vmem:[%s1 + $0x240] sm:$0xff]
    %v122 = vld [vmem:[%s1 + $0x248] sm:$0xff]
    %v123 = vld [vmem:[%s1 + $0x250] sm:$0xff]
    %v124 = vld [vmem:[%s1 + $0x258] sm:$0xff]
    %v125 = vld [vmem:[%s1 + $0x260] sm:$0xff]
    %v126 = vld [vmem:[%s1 + $0x268] sm:$0xff]
    %v127 = vld [vmem:[%s1 + $0x270] sm:$0xff]
    %v128 = vld [vmem:[%s1 + $0x278] sm:$0xff]
    %v129 = vld [vmem:[%s1 + $0x280] sm:$0xff]
    %v130 = vld [vmem:[%s1 + $0x288] sm:$0xff]
    %v131 = vld [vmem:[%s1 + $0x290] sm:$0xff]
    %v132 = vld [vmem:[%s1 + $0x298] sm:$0xff]
    %v133 = vld [vmem:[%s1 + $0x2a0] sm:$0xff]
    %v134 = vld [vmem:[%s1 + $0x2a8] sm:$0xff]
    %v135 = vld [vmem:[%s1 + $0x2b0] sm:$0xff]
    %v136 = vld [vmem:[%s1 + $0x2b8] sm:$0xff]
    %v137 = vld [vmem:[%s1 + $0x2c0] sm:$0xff]
    %v138 = vld [vmem:[%s1 + $0x2c8] sm:$0xff]
    %v139 = vld [vmem:[%s1 + $0x2d0] sm:$0xff]
    %v140 = vld [vmem:[%s1 + $0x2d8] sm:$0xff]
    %v141 = vld [vmem:[%s1 + $0x2e0] sm:$0xff]
    %v142 = vld [vmem:[%s1 + $0x2e8] sm:$0xff]
    %v143 = vld [vmem:[%s1 + $0x2f0] sm:$0xff]
    %v144 = vld [vmem:[%s1 + $0x2f8] sm:$0xff]
    %v145 = vld [vmem:[%s1 + $0x300] sm:$0xff]
    %v146 = vld [vmem:[%s1 + $0x308] sm:$0xff]
    %v147 = vld [vmem:[%s1 + $0x310] sm:$0xff]
    %v148 = vld [vmem:[%s1 + $0x318] sm:$0xff]
    %v149 = vld [vmem:[%s1 + $0x320] sm:$0xff]
    %v150 = vld [vmem:[%s1 + $0x328] sm:$0xff]
    %v151 = vld [vmem:[%s1 + $0x330] sm:$0xff]
    %v152 = vld [vmem:[%s1 + $0x338] sm:$0xff]
    %v153 = vld [vmem:[%s1 + $0x340] sm:$0xff]
    %v154 = vld [vmem:[%s1 + $0x348] sm:$0xff]
    %v155 = vld [vmem:[%s1 + $0x350] sm:$0xff]
    %v156 = vld [vmem:[%s1 + $0x358] sm:$0xff]
    %v157 = vld [vmem:[%s1 + $0x360] sm:$0xff]
    %v158 = vld [vmem:[%s1 + $0x368] sm:$0xff]
    %v159 = vld [vmem:[%s1 + $0x370] sm:$0xff]
    %v160 = vld [vmem:[%s1 + $0x378] sm:$0xff]
    %v161 = vld [vmem:[%s1 + $0x380] sm:$0xff]
    %v162 = vld [vmem:[%s1 + $0x388] sm:$0xff]
    %v163 = vld [vmem:[%s1 + $0x390] sm:$0xff]
    %v164 = vld [vmem:[%s1 + $0x398] sm:$0xff]
    %v165 = vld [vmem:[%s1 + $0x3a0] sm:$0xff]
    %v166 = vld [vmem:[%s1 + $0x3a8] sm:$0xff]
    %v167 = vld [vmem:[%s1 + $0x3b0] sm:$0xff]
    %v168 = vld [vmem:[%s1 + $0x3b8] sm:$0xff]
    %v169 = vld [vmem:[%s1 + $0x3c0] sm:$0xff]
    %v170 = vld [vmem:[%s1 + $0x3c8] sm:$0xff]
    %v171 = vld [vmem:[%s1 + $0x3d0] sm:$0xff]
    %v172 = vld [vmem:[%s1 + $0x3d8] sm:$0xff]
    %v173 = vld [vmem:[%s1 + $0x3e0] sm:$0xff]
    %v174 = vld [vmem:[%s1 + $0x3e8] sm:$0xff]
    %v175 = vld [vmem:[%s1 + $0x3f0] sm:$0xff]
    %v176 = vld [vmem:[%s1 + $0x3f8] sm:$0xff]
    %v181 = vunpack.c.l.b16 %v45
    %v182 = vunpack.c.h.b16 %v45
    %v183 = vunpack.c.l.b16 %v46
    %v184 = vunpack.c.h.b16 %v46
    %v185 = vunpack.c.l.b16 %v47
    %v186 = vunpack.c.h.b16 %v47
    %v187 = vunpack.c.l.b16 %v48
    %v188 = vunpack.c.h.b16 %v48
    %v189 = vpack.c.b16 %v181, %v181
    %v190 = vpack.c.b16 %v182, %v182
    %v191 = vpack.c.b16 %v183, %v183
    %v192 = vpack.c.b16 %v184, %v184
    %v193 = vpack.c.b16 %v185, %v185
    %v194 = vpack.c.b16 %v186, %v186
    %v195 = vpack.c.b16 %v187, %v187
    %v196 = vpack.c.b16 %v188, %v188
    %v333 = vunpack.c.l.b16 %v49
    %v334 = vunpack.c.h.b16 %v49
    %v335 = vunpack.c.l.b16 %v50
    %v336 = vunpack.c.h.b16 %v50
    %v337 = vunpack.c.l.b16 %v51
    %v338 = vunpack.c.h.b16 %v51
    %v339 = vunpack.c.l.b16 %v52
    %v340 = vunpack.c.h.b16 %v52
    %v341 = vunpack.c.l.b16 %v53
    %v342 = vunpack.c.h.b16 %v53
    %v343 = vunpack.c.l.b16 %v54
    %v344 = vunpack.c.h.b16 %v54
    %v345 = vunpack.c.l.b16 %v55
    %v346 = vunpack.c.h.b16 %v55
    %v347 = vunpack.c.l.b16 %v56
    %v348 = vunpack.c.h.b16 %v56
    %v349 = vunpack.c.l.b16 %v57
    %v350 = vunpack.c.h.b16 %v57
    %v351 = vunpack.c.l.b16 %v58
    %v352 = vunpack.c.h.b16 %v58
    %v353 = vunpack.c.l.b16 %v59
    %v354 = vunpack.c.h.b16 %v59
    %v355 = vunpack.c.l.b16 %v60
    %v356 = vunpack.c.h.b16 %v60
    %v357 = vunpack.c.l.b16 %v61
    %v358 = vunpack.c.h.b16 %v61
    %v359 = vunpack.c.l.b16 %v62
    %v360 = vunpack.c.h.b16 %v62
    %v361 = vunpack.c.l.b16 %v63
    %v362 = vunpack.c.h.b16 %v63
    %v363 = vunpack.c.l.b16 %v64
    %v364 = vunpack.c.h.b16 %v64
    %v365 = vunpack.c.l.b16 %v65
    %v366 = vunpack.c.h.b16 %v65
    %v367 = vunpack.c.l.b16 %v66
    %v368 = vunpack.c.h.b16 %v66
    %v369 = vunpack.c.l.b16 %v67
    %v370 = vunpack.c.h.b16 %v67
    %v371 = vunpack.c.l.b16 %v68
    %v372 = vunpack.c.h.b16 %v68
    %v373 = vunpack.c.l.b16 %v69
    %v374 = vunpack.c.h.b16 %v69
    %v375 = vunpack.c.l.b16 %v70
    %v376 = vunpack.c.h.b16 %v70
    %v377 = vunpack.c.l.b16 %v71
    %v378 = vunpack.c.h.b16 %v71
    %v379 = vunpack.c.l.b16 %v72
    %v380 = vunpack.c.h.b16 %v72
    %v381 = vunpack.c.l.b16 %v73
    %v382 = vunpack.c.h.b16 %v73
    %v383 = vunpack.c.l.b16 %v74
    %v384 = vunpack.c.h.b16 %v74
    %v385 = vunpack.c.l.b16 %v75
    %v386 = vunpack.c.h.b16 %v75
    %v387 = vunpack.c.l.b16 %v76
    %v388 = vunpack.c.h.b16 %v76
    %v389 = vunpack.c.l.b16 %v77
    %v390 = vunpack.c.h.b16 %v77
    %v391 = vunpack.c.l.b16 %v78
    %v392 = vunpack.c.h.b16 %v78
    %v393 = vunpack.c.l.b16 %v79
    %v394 = vunpack.c.h.b16 %v79
    %v395 = vunpack.c.l.b16 %v80
    %v396 = vunpack.c.h.b16 %v80
    %v397 = vunpack.c.l.b16 %v81
    %v398 = vunpack.c.h.b16 %v81
    %v399 = vunpack.c.l.b16 %v82
    %v400 = vunpack.c.h.b16 %v82
    %v401 = vunpack.c.l.b16 %v83
    %v402 = vunpack.c.h.b16 %v83
    %v403 = vunpack.c.l.b16 %v84
    %v404 = vunpack.c.h.b16 %v84
    %v405 = vunpack.c.l.b16 %v85
    %v406 = vunpack.c.h.b16 %v85
    %v407 = vunpack.c.l.b16 %v86
    %v408 = vunpack.c.h.b16 %v86
    %v409 = vunpack.c.l.b16 %v87
    %v410 = vunpack.c.h.b16 %v87
    %v411 = vunpack.c.l.b16 %v88
    %v412 = vunpack.c.h.b16 %v88
    %v413 = vunpack.c.l.b16 %v89
    %v414 = vunpack.c.h.b16 %v89
    %v415 = vunpack.c.l.b16 %v90
    %v416 = vunpack.c.h.b16 %v90
    %v417 = vunpack.c.l.b16 %v91
    %v418 = vunpack.c.h.b16 %v91
    %v419 = vunpack.c.l.b16 %v92
    %v420 = vunpack.c.h.b16 %v92
    %v421 = vunpack.c.l.b16 %v93
    %v422 = vunpack.c.h.b16 %v93
    %v423 = vunpack.c.l.b16 %v94
    %v424 = vunpack.c.h.b16 %v94
    %v425 = vunpack.c.l.b16 %v95
    %v426 = vunpack.c.h.b16 %v95
    %v427 = vunpack.c.l.b16 %v96
    %v428 = vunpack.c.h.b16 %v96
    %v429 = vunpack.c.l.b16 %v97
    %v430 = vunpack.c.h.b16 %v97
    %v431 = vunpack.c.l.b16 %v98
    %v432 = vunpack.c.h.b16 %v98
    %v433 = vunpack.c.l.b16 %v99
    %v434 = vunpack.c.h.b16 %v99
    %v435 = vunpack.c.l.b16 %v100
    %v436 = vunpack.c.h.b16 %v100
    %v437 = vunpack.c.l.b16 %v101
    %v438 = vunpack.c.h.b16 %v101
    %v439 = vunpack.c.l.b16 %v102
    %v440 = vunpack.c.h.b16 %v102
    %v441 = vunpack.c.l.b16 %v103
    %v442 = vunpack.c.h.b16 %v103
    %v443 = vunpack.c.l.b16 %v104
    %v444 = vunpack.c.h.b16 %v104
    %v445 = vunpack.c.l.b16 %v105
    %v446 = vunpack.c.h.b16 %v105
    %v447 = vunpack.c.l.b16 %v106
    %v448 = vunpack.c.h.b16 %v106
    %v449 = vunpack.c.l.b16 %v107
    %v450 = vunpack.c.h.b16 %v107
    %v451 = vunpack.c.l.b16 %v108
    %v452 = vunpack.c.h.b16 %v108
    %v453 = vunpack.c.l.b16 %v109
    %v454 = vunpack.c.h.b16 %v109
    %v455 = vunpack.c.l.b16 %v110
    %v456 = vunpack.c.h.b16 %v110
    %v457 = vunpack.c.l.b16 %v111
    %v458 = vunpack.c.h.b16 %v111
    %v459 = vunpack.c.l.b16 %v112
    %v460 = vunpack.c.h.b16 %v112
    %v461 = vunpack.c.l.b16 %v113
    %v462 = vunpack.c.h.b16 %v113
    %v463 = vunpack.c.l.b16 %v114
    %v464 = vunpack.c.h.b16 %v114
    %v465 = vunpack.c.l.b16 %v115
    %v466 = vunpack.c.h.b16 %v115
    %v467 = vunpack.c.l.b16 %v116
    %v468 = vunpack.c.h.b16 %v116
    %v469 = vunpack.c.l.b16 %v117
    %v470 = vunpack.c.h.b16 %v117
    %v471 = vunpack.c.l.b16 %v118
    %v472 = vunpack.c.h.b16 %v118
    %v473 = vunpack.c.l.b16 %v119
    %v474 = vunpack.c.h.b16 %v119
    %v475 = vunpack.c.l.b16 %v120
    %v476 = vunpack.c.h.b16 %v120
    %v477 = vunpack.c.l.b16 %v121
    %v478 = vunpack.c.h.b16 %v121
    %v479 = vunpack.c.l.b16 %v122
    %v480 = vunpack.c.h.b16 %v122
    %v481 = vunpack.c.l.b16 %v123
    %v482 = vunpack.c.h.b16 %v123
    %v483 = vunpack.c.l.b16 %v124
    %v484 = vunpack.c.h.b16 %v124
    %v485 = vunpack.c.l.b16 %v125
    %v486 = vunpack.c.h.b16 %v125
    %v487 = vunpack.c.l.b16 %v126
    %v488 = vunpack.c.h.b16 %v126
    %v489 = vunpack.c.l.b16 %v127
    %v490 = vunpack.c.h.b16 %v127
    %v491 = vunpack.c.l.b16 %v128
    %v492 = vunpack.c.h.b16 %v128
    %v493 = vunpack.c.l.b16 %v129
    %v494 = vunpack.c.h.b16 %v129
    %v495 = vunpack.c.l.b16 %v130
    %v496 = vunpack.c.h.b16 %v130
    %v497 = vunpack.c.l.b16 %v131
    %v498 = vunpack.c.h.b16 %v131
    %v499 = vunpack.c.l.b16 %v132
    %v500 = vunpack.c.h.b16 %v132
    %v501 = vunpack.c.l.b16 %v133
    %v502 = vunpack.c.h.b16 %v133
    %v503 = vunpack.c.l.b16 %v134
    %v504 = vunpack.c.h.b16 %v134
    %v505 = vunpack.c.l.b16 %v135
    %v506 = vunpack.c.h.b16 %v135
    %v507 = vunpack.c.l.b16 %v136
    %v508 = vunpack.c.h.b16 %v136
    %v509 = vunpack.c.l.b16 %v137
    %v510 = vunpack.c.h.b16 %v137
    %v511 = vunpack.c.l.b16 %v138
    %v512 = vunpack.c.h.b16 %v138
    %v513 = vunpack.c.l.b16 %v139
    %v514 = vunpack.c.h.b16 %v139
    %v515 = vunpack.c.l.b16 %v140
    %v516 = vunpack.c.h.b16 %v140
    %v517 = vunpack.c.l.b16 %v141
    %v518 = vunpack.c.h.b16 %v141
    %v519 = vunpack.c.l.b16 %v142
    %v520 = vunpack.c.h.b16 %v142
    %v521 = vunpack.c.l.b16 %v143
    %v522 = vunpack.c.h.b16 %v143
    %v523 = vunpack.c.l.b16 %v144
    %v524 = vunpack.c.h.b16 %v144
    %v525 = vunpack.c.l.b16 %v145
    %v526 = vunpack.c.h.b16 %v145
    %v527 = vunpack.c.l.b16 %v146
    %v528 = vunpack.c.h.b16 %v146
    %v529 = vunpack.c.l.b16 %v147
    %v530 = vunpack.c.h.b16 %v147
    %v531 = vunpack.c.l.b16 %v148
    %v532 = vunpack.c.h.b16 %v148
    %v533 = vunpack.c.l.b16 %v149
    %v534 = vunpack.c.h.b16 %v149
    %v535 = vunpack.c.l.b16 %v150
    %v536 = vunpack.c.h.b16 %v150
    %v537 = vunpack.c.l.b16 %v151
    %v538 = vunpack.c.h.b16 %v151
    %v539 = vunpack.c.l.b16 %v152
    %v540 = vunpack.c.h.b16 %v152
    %v541 = vunpack.c.l.b16 %v153
    %v542 = vunpack.c.h.b16 %v153
    %v543 = vunpack.c.l.b16 %v154
    %v544 = vunpack.c.h.b16 %v154
    %v545 = vunpack.c.l.b16 %v155
    %v546 = vunpack.c.h.b16 %v155
    %v547 = vunpack.c.l.b16 %v156
    %v548 = vunpack.c.h.b16 %v156
    %v549 = vunpack.c.l.b16 %v157
    %v550 = vunpack.c.h.b16 %v157
    %v551 = vunpack.c.l.b16 %v158
    %v552 = vunpack.c.h.b16 %v158
    %v553 = vunpack.c.l.b16 %v159
    %v554 = vunpack.c.h.b16 %v159
    %v555 = vunpack.c.l.b16 %v160
    %v556 = vunpack.c.h.b16 %v160
    %v557 = vunpack.c.l.b16 %v161
    %v558 = vunpack.c.h.b16 %v161
    %v559 = vunpack.c.l.b16 %v162
    %v560 = vunpack.c.h.b16 %v162
    %v561 = vunpack.c.l.b16 %v163
    %v562 = vunpack.c.h.b16 %v163
    %v563 = vunpack.c.l.b16 %v164
    %v564 = vunpack.c.h.b16 %v164
    %v565 = vunpack.c.l.b16 %v165
    %v566 = vunpack.c.h.b16 %v165
    %v567 = vunpack.c.l.b16 %v166
    %v568 = vunpack.c.h.b16 %v166
    %v569 = vunpack.c.l.b16 %v167
    %v570 = vunpack.c.h.b16 %v167
    %v571 = vunpack.c.l.b16 %v168
    %v572 = vunpack.c.h.b16 %v168
    %v573 = vunpack.c.l.b16 %v169
    %v574 = vunpack.c.h.b16 %v169
    %v575 = vunpack.c.l.b16 %v170
    %v576 = vunpack.c.h.b16 %v170
    %v577 = vunpack.c.l.b16 %v171
    %v578 = vunpack.c.h.b16 %v171
    %v579 = vunpack.c.l.b16 %v172
    %v580 = vunpack.c.h.b16 %v172
    %v581 = vunpack.c.l.b16 %v173
    %v582 = vunpack.c.h.b16 %v173
    %v583 = vunpack.c.l.b16 %v174
    %v584 = vunpack.c.h.b16 %v174
    %v585 = vunpack.c.l.b16 %v175
    %v586 = vunpack.c.h.b16 %v175
    %v587 = vunpack.c.l.b16 %v176
    %v588 = vunpack.c.h.b16 %v176
    %v589 = vpack.c.b16 %v335, %v333
    %v590 = vpack.c.b16 %v336, %v334
    %v591 = vpack.c.b16 %v339, %v337
    %v592 = vpack.c.b16 %v340, %v338
    %v593 = vpack.c.b16 %v343, %v341
    %v594 = vpack.c.b16 %v344, %v342
    %v595 = vpack.c.b16 %v347, %v345
    %v596 = vpack.c.b16 %v348, %v346
    %v597 = vpack.c.b16 %v351, %v349
    %v598 = vpack.c.b16 %v352, %v350
    %v599 = vpack.c.b16 %v355, %v353
    %v600 = vpack.c.b16 %v356, %v354
    %v601 = vpack.c.b16 %v359, %v357
    %v602 = vpack.c.b16 %v360, %v358
    %v603 = vpack.c.b16 %v363, %v361
    %v604 = vpack.c.b16 %v364, %v362
    %v605 = vpack.c.b16 %v367, %v365
    %v606 = vpack.c.b16 %v368, %v366
    %v607 = vpack.c.b16 %v371, %v369
    %v608 = vpack.c.b16 %v372, %v370
    %v609 = vpack.c.b16 %v375, %v373
    %v610 = vpack.c.b16 %v376, %v374
    %v611 = vpack.c.b16 %v379, %v377
    %v612 = vpack.c.b16 %v380, %v378
    %v613 = vpack.c.b16 %v383, %v381
    %v614 = vpack.c.b16 %v384, %v382
    %v615 = vpack.c.b16 %v387, %v385
    %v616 = vpack.c.b16 %v388, %v386
    %v617 = vpack.c.b16 %v391, %v389
    %v618 = vpack.c.b16 %v392, %v390
    %v619 = vpack.c.b16 %v395, %v393
    %v620 = vpack.c.b16 %v396, %v394
    %v621 = vpack.c.b16 %v399, %v397
    %v622 = vpack.c.b16 %v400, %v398
    %v623 = vpack.c.b16 %v403, %v401
    %v624 = vpack.c.b16 %v404, %v402
    %v625 = vpack.c.b16 %v407, %v405
    %v626 = vpack.c.b16 %v408, %v406
    %v627 = vpack.c.b16 %v411, %v409
    %v628 = vpack.c.b16 %v412, %v410
    %v629 = vpack.c.b16 %v415, %v413
    %v630 = vpack.c.b16 %v416, %v414
    %v631 = vpack.c.b16 %v419, %v417
    %v632 = vpack.c.b16 %v420, %v418
    %v633 = vpack.c.b16 %v423, %v421
    %v634 = vpack.c.b16 %v424, %v422
    %v635 = vpack.c.b16 %v427, %v425
    %v636 = vpack.c.b16 %v428, %v426
    %v637 = vpack.c.b16 %v431, %v429
    %v638 = vpack.c.b16 %v432, %v430
    %v639 = vpack.c.b16 %v435, %v433
    %v640 = vpack.c.b16 %v436, %v434
    %v641 = vpack.c.b16 %v439, %v437
    %v642 = vpack.c.b16 %v440, %v438
    %v643 = vpack.c.b16 %v443, %v441
    %v644 = vpack.c.b16 %v444, %v442
    %v645 = vpack.c.b16 %v447, %v445
    %v646 = vpack.c.b16 %v448, %v446
    %v647 = vpack.c.b16 %v451, %v449
    %v648 = vpack.c.b16 %v452, %v450
    %v649 = vpack.c.b16 %v455, %v453
    %v650 = vpack.c.b16 %v456, %v454
    %v651 = vpack.c.b16 %v459, %v457
    %v652 = vpack.c.b16 %v460, %v458
    %v653 = vpack.c.b16 %v463, %v461
    %v654 = vpack.c.b16 %v464, %v462
    %v655 = vpack.c.b16 %v467, %v465
    %v656 = vpack.c.b16 %v468, %v466
    %v657 = vpack.c.b16 %v471, %v469
    %v658 = vpack.c.b16 %v472, %v470
    %v659 = vpack.c.b16 %v475, %v473
    %v660 = vpack.c.b16 %v476, %v474
    %v661 = vpack.c.b16 %v479, %v477
    %v662 = vpack.c.b16 %v480, %v478
    %v663 = vpack.c.b16 %v483, %v481
    %v664 = vpack.c.b16 %v484, %v482
    %v665 = vpack.c.b16 %v487, %v485
    %v666 = vpack.c.b16 %v488, %v486
    %v667 = vpack.c.b16 %v491, %v489
    %v668 = vpack.c.b16 %v492, %v490
    %v669 = vpack.c.b16 %v495, %v493
    %v670 = vpack.c.b16 %v496, %v494
    %v671 = vpack.c.b16 %v499, %v497
    %v672 = vpack.c.b16 %v500, %v498
    %v673 = vpack.c.b16 %v503, %v501
    %v674 = vpack.c.b16 %v504, %v502
    %v675 = vpack.c.b16 %v507, %v505
    %v676 = vpack.c.b16 %v508, %v506
    %v677 = vpack.c.b16 %v511, %v509
    %v678 = vpack.c.b16 %v512, %v510
    %v679 = vpack.c.b16 %v515, %v513
    %v680 = vpack.c.b16 %v516, %v514
    %v681 = vpack.c.b16 %v519, %v517
    %v682 = vpack.c.b16 %v520, %v518
    %v683 = vpack.c.b16 %v523, %v521
    %v684 = vpack.c.b16 %v524, %v522
    %v685 = vpack.c.b16 %v527, %v525
    %v686 = vpack.c.b16 %v528, %v526
    %v687 = vpack.c.b16 %v531, %v529
    %v688 = vpack.c.b16 %v532, %v530
    %v689 = vpack.c.b16 %v535, %v533
    %v690 = vpack.c.b16 %v536, %v534
    %v691 = vpack.c.b16 %v539, %v537
    %v692 = vpack.c.b16 %v540, %v538
    %v693 = vpack.c.b16 %v543, %v541
    %v694 = vpack.c.b16 %v544, %v542
    %v695 = vpack.c.b16 %v547, %v545
    %v696 = vpack.c.b16 %v548, %v546
    %v697 = vpack.c.b16 %v551, %v549
    %v698 = vpack.c.b16 %v552, %v550
    %v699 = vpack.c.b16 %v555, %v553
    %v700 = vpack.c.b16 %v556, %v554
    %v701 = vpack.c.b16 %v559, %v557
    %v702 = vpack.c.b16 %v560, %v558
    %v703 = vpack.c.b16 %v563, %v561
    %v704 = vpack.c.b16 %v564, %v562
    %v705 = vpack.c.b16 %v567, %v565
    %v706 = vpack.c.b16 %v568, %v566
    %v707 = vpack.c.b16 %v571, %v569
    %v708 = vpack.c.b16 %v572, %v570
    %v709 = vpack.c.b16 %v575, %v573
    %v710 = vpack.c.b16 %v576, %v574
    %v711 = vpack.c.b16 %v579, %v577
    %v712 = vpack.c.b16 %v580, %v578
    %v713 = vpack.c.b16 %v583, %v581
    %v714 = vpack.c.b16 %v584, %v582
    %v715 = vpack.c.b16 %v587, %v585
    %v716 = vpack.c.b16 %v588, %v586
    %845 = vmatpush.bf16.msra.mxu0 %v603
    %846 = vmatpush.bf16.msra.mxu0 %v601
    %847 = vmatpush.bf16.msra.mxu0 %v599
    %848 = vmatpush.bf16.msra.mxu0 %v597
    %849 = vmatpush.bf16.msra.mxu0 %v595
    %850 = vmatpush.bf16.msra.mxu0 %v593
    %851 = vmatpush.bf16.msra.mxu0 %v591
    %852 = vmatpush.bf16.msra.mxu0 %v589
    %853 = vmatmul.bf16.gmra.mxu0 %v189
    %v854 = vpop.f32.mrf.mxu0
    %v855 = vadd.f32 0.0, %v854
    %v856 = vpop.f32.mrf.mxu0
    %857 = vdwg.mxu0
    %858 = vmatpush.bf16.msra.mxu0 %v619
    %859 = vmatpush.bf16.msra.mxu0 %v617
    %860 = vmatpush.bf16.msra.mxu0 %v615
    %861 = vmatpush.bf16.msra.mxu0 %v613
    %862 = vmatpush.bf16.msra.mxu0 %v611
    %863 = vmatpush.bf16.msra.mxu0 %v609
    %864 = vmatpush.bf16.msra.mxu0 %v607
    %865 = vmatpush.bf16.msra.mxu0 %v605
    %866 = vmatmul.bf16.gmra.mxu0 %v190
    %v867 = vpop.f32.mrf.mxu0
    %v868 = vadd.f32 %v855, %v867
    %v869 = vpop.f32.mrf.mxu0
    %870 = vdwg.mxu0
    %871 = vmatpush.bf16.msra.mxu0 %v635
    %872 = vmatpush.bf16.msra.mxu0 %v633
    %873 = vmatpush.bf16.msra.mxu0 %v631
    %874 = vmatpush.bf16.msra.mxu0 %v629
    %875 = vmatpush.bf16.msra.mxu0 %v627
    %876 = vmatpush.bf16.msra.mxu0 %v625
    %877 = vmatpush.bf16.msra.mxu0 %v623
    %878 = vmatpush.bf16.msra.mxu0 %v621
    %879 = vmatmul.bf16.gmra.mxu0 %v191
    %v880 = vpop.f32.mrf.mxu0
    %v881 = vadd.f32 %v868, %v880
    %v882 = vpop.f32.mrf.mxu0
    %883 = vdwg.mxu0
    %884 = vmatpush.bf16.msra.mxu0 %v651
    %885 = vmatpush.bf16.msra.mxu0 %v649
    %886 = vmatpush.bf16.msra.mxu0 %v647
    %887 = vmatpush.bf16.msra.mxu0 %v645
    %888 = vmatpush.bf16.msra.mxu0 %v643
    %889 = vmatpush.bf16.msra.mxu0 %v641
    %890 = vmatpush.bf16.msra.mxu0 %v639
    %891 = vmatpush.bf16.msra.mxu0 %v637
    %892 = vmatmul.bf16.gmra.mxu0 %v192
    %v893 = vpop.f32.mrf.mxu0
    %v894 = vadd.f32 %v881, %v893
    %v895 = vpop.f32.mrf.mxu0
    %896 = vdwg.mxu0
    %897 = vmatpush.bf16.msra.mxu0 %v667
    %898 = vmatpush.bf16.msra.mxu0 %v665
    %899 = vmatpush.bf16.msra.mxu0 %v663
    %900 = vmatpush.bf16.msra.mxu0 %v661
    %901 = vmatpush.bf16.msra.mxu0 %v659
    %902 = vmatpush.bf16.msra.mxu0 %v657
    %903 = vmatpush.bf16.msra.mxu0 %v655
    %904 = vmatpush.bf16.msra.mxu0 %v653
    %905 = vmatmul.bf16.gmra.mxu0 %v193
    %v906 = vpop.f32.mrf.mxu0
    %v907 = vadd.f32 %v894, %v906
    %v908 = vpop.f32.mrf.mxu0
    %909 = vdwg.mxu0
    %910 = vmatpush.bf16.msra.mxu0 %v683
    %911 = vmatpush.bf16.msra.mxu0 %v681
    %912 = vmatpush.bf16.msra.mxu0 %v679
    %913 = vmatpush.bf16.msra.mxu0 %v677
    %914 = vmatpush.bf16.msra.mxu0 %v675
    %915 = vmatpush.bf16.msra.mxu0 %v673
    %916 = vmatpush.bf16.msra.mxu0 %v671
    %917 = vmatpush.bf16.msra.mxu0 %v669
    %918 = vmatmul.bf16.gmra.mxu0 %v194
    %v919 = vpop.f32.mrf.mxu0
    %v920 = vadd.f32 %v907, %v919
    %v921 = vpop.f32.mrf.mxu0
    %922 = vdwg.mxu0
    %923 = vmatpush.bf16.msra.mxu0 %v699
    %924 = vmatpush.bf16.msra.mxu0 %v697
    %925 = vmatpush.bf16.msra.mxu0 %v695
    %926 = vmatpush.bf16.msra.mxu0 %v693
    %927 = vmatpush.bf16.msra.mxu0 %v691
    %928 = vmatpush.bf16.msra.mxu0 %v689
    %929 = vmatpush.bf16.msra.mxu0 %v687
    %930 = vmatpush.bf16.msra.mxu0 %v685
    %931 = vmatmul.bf16.gmra.mxu0 %v195
    %v932 = vpop.f32.mrf.mxu0
    %v933 = vadd.f32 %v920, %v932
    %v934 = vpop.f32.mrf.mxu0
    %935 = vdwg.mxu0
    %936 = vmatpush.bf16.msra.mxu0 %v715
    %937 = vmatpush.bf16.msra.mxu0 %v713
    %938 = vmatpush.bf16.msra.mxu0 %v711
    %939 = vmatpush.bf16.msra.mxu0 %v709
    %940 = vmatpush.bf16.msra.mxu0 %v707
    %941 = vmatpush.bf16.msra.mxu0 %v705
    %942 = vmatpush.bf16.msra.mxu0 %v703
    %943 = vmatpush.bf16.msra.mxu0 %v701
    %944 = vmatmul.bf16.gmra.mxu0 %v196
    %v945 = vpop.f32.mrf.mxu0
    %v946 = vadd.f32 %v933, %v945
    %v947 = vpop.f32.mrf.mxu0
    %948 = vdwg.mxu0
    %949 = vmatpush.bf16.msra.mxu0 %v604
    %950 = vmatpush.bf16.msra.mxu0 %v602
    %951 = vmatpush.bf16.msra.mxu0 %v600
    %952 = vmatpush.bf16.msra.mxu0 %v598
    %953 = vmatpush.bf16.msra.mxu0 %v596
    %954 = vmatpush.bf16.msra.mxu0 %v594
    %955 = vmatpush.bf16.msra.mxu0 %v592
    %956 = vmatpush.bf16.msra.mxu0 %v590
    %957 = vmatmul.bf16.gmra.mxu0 %v189
    %v958 = vpop.f32.mrf.mxu0
    %v959 = vadd.f32 0.0, %v958
    %v960 = vpop.f32.mrf.mxu0
    %961 = vdwg.mxu0
    %962 = vmatpush.bf16.msra.mxu0 %v620
    %963 = vmatpush.bf16.msra.mxu0 %v618
    %964 = vmatpush.bf16.msra.mxu0 %v616
    %965 = vmatpush.bf16.msra.mxu0 %v614
    %966 = vmatpush.bf16.msra.mxu0 %v612
    %967 = vmatpush.bf16.msra.mxu0 %v610
    %968 = vmatpush.bf16.msra.mxu0 %v608
    %969 = vmatpush.bf16.msra.mxu0 %v606
    %970 = vmatmul.bf16.gmra.mxu0 %v190
    %v971 = vpop.f32.mrf.mxu0
    %v972 = vadd.f32 %v959, %v971
    %v973 = vpop.f32.mrf.mxu0
    %974 = vdwg.mxu0
    %975 = vmatpush.bf16.msra.mxu0 %v636
    %976 = vmatpush.bf16.msra.mxu0 %v634
    %977 = vmatpush.bf16.msra.mxu0 %v632
    %978 = vmatpush.bf16.msra.mxu0 %v630
    %979 = vmatpush.bf16.msra.mxu0 %v628
    %980 = vmatpush.bf16.msra.mxu0 %v626
    %981 = vmatpush.bf16.msra.mxu0 %v624
    %982 = vmatpush.bf16.msra.mxu0 %v622
    %983 = vmatmul.bf16.gmra.mxu0 %v191
    %v984 = vpop.f32.mrf.mxu0
    %v985 = vadd.f32 %v972, %v984
    %v986 = vpop.f32.mrf.mxu0
    %987 = vdwg.mxu0
    %988 = vmatpush.bf16.msra.mxu0 %v652
    %989 = vmatpush.bf16.msra.mxu0 %v650
    %990 = vmatpush.bf16.msra.mxu0 %v648
    %991 = vmatpush.bf16.msra.mxu0 %v646
    %992 = vmatpush.bf16.msra.mxu0 %v644
    %993 = vmatpush.bf16.msra.mxu0 %v642
    %994 = vmatpush.bf16.msra.mxu0 %v640
    %995 = vmatpush.bf16.msra.mxu0 %v638
    %996 = vmatmul.bf16.gmra.mxu0 %v192
    %v997 = vpop.f32.mrf.mxu0
    %v998 = vadd.f32 %v985, %v997
    %v999 = vpop.f32.mrf.mxu0
    %1000 = vdwg.mxu0
    %1001 = vmatpush.bf16.msra.mxu0 %v668
    %1002 = vmatpush.bf16.msra.mxu0 %v666
    %1003 = vmatpush.bf16.msra.mxu0 %v664
    %1004 = vmatpush.bf16.msra.mxu0 %v662
    %1005 = vmatpush.bf16.msra.mxu0 %v660
    %1006 = vmatpush.bf16.msra.mxu0 %v658
    %1007 = vmatpush.bf16.msra.mxu0 %v656
    %1008 = vmatpush.bf16.msra.mxu0 %v654
    %1009 = vmatmul.bf16.gmra.mxu0 %v193
    %v1010 = vpop.f32.mrf.mxu0
    %v1011 = vadd.f32 %v998, %v1010
    %v1012 = vpop.f32.mrf.mxu0
    %1013 = vdwg.mxu0
    %1014 = vmatpush.bf16.msra.mxu0 %v684
    %1015 = vmatpush.bf16.msra.mxu0 %v682
    %1016 = vmatpush.bf16.msra.mxu0 %v680
    %1017 = vmatpush.bf16.msra.mxu0 %v678
    %1018 = vmatpush.bf16.msra.mxu0 %v676
    %1019 = vmatpush.bf16.msra.mxu0 %v674
    %1020 = vmatpush.bf16.msra.mxu0 %v672
    %1021 = vmatpush.bf16.msra.mxu0 %v670
    %1022 = vmatmul.bf16.gmra.mxu0 %v194
    %v1023 = vpop.f32.mrf.mxu0
    %v1024 = vadd.f32 %v1011, %v1023
    %v1025 = vpop.f32.mrf.mxu0
    %1026 = vdwg.mxu0
    %1027 = vmatpush.bf16.msra.mxu0 %v700
    %1028 = vmatpush.bf16.msra.mxu0 %v698
    %1029 = vmatpush.bf16.msra.mxu0 %v696
    %1030 = vmatpush.bf16.msra.mxu0 %v694
    %1031 = vmatpush.bf16.msra.mxu0 %v692
    %1032 = vmatpush.bf16.msra.mxu0 %v690
    %1033 = vmatpush.bf16.msra.mxu0 %v688
    %1034 = vmatpush.bf16.msra.mxu0 %v686
    %1035 = vmatmul.bf16.gmra.mxu0 %v195
    %v1036 = vpop.f32.mrf.mxu0
    %v1037 = vadd.f32 %v1024, %v1036
    %v1038 = vpop.f32.mrf.mxu0
    %1039 = vdwg.mxu0
    %1040 = vmatpush.bf16.msra.mxu0 %v716
    %1041 = vmatpush.bf16.msra.mxu0 %v714
    %1042 = vmatpush.bf16.msra.mxu0 %v712
    %1043 = vmatpush.bf16.msra.mxu0 %v710
    %1044 = vmatpush.bf16.msra.mxu0 %v708
    %1045 = vmatpush.bf16.msra.mxu0 %v706
    %1046 = vmatpush.bf16.msra.mxu0 %v704
    %1047 = vmatpush.bf16.msra.mxu0 %v702
    %1048 = vmatmul.bf16.gmra.mxu0 %v196
    %v1049 = vpop.f32.mrf.mxu0
    %v1050 = vadd.f32 %v1037, %v1049
    %v1051 = vpop.f32.mrf.mxu0
    %1052 = vdwg.mxu0
    %v1053 = vadd.f32 %v43, %v946
    %v1054 = vadd.f32 %v44, %v1050
    %1055 = vst [vmem:[#allocation2] sm:$0xff] %v1053
    %1056 = vst [vmem:[#allocation2 + $0x8] sm:$0xff] %v1054
    // Predicated region
    $region30: #{byol_forward.1} parent=1 // pred_check
      %p1057 = pneg %p37
    $region31: #{byol_forward.1} parent=1 // pred_check_branch
      %1059 = sbr.rel (%p1057) target = $region33
    $region32: #{byol_forward.1} parent=1 // pred_region
      %v1060 = vld [vmem:[#allocation2] sm:$0xff]
      %v1061 = vld [vmem:[#allocation2 + $0x8] sm:$0xff]
      %v1062 = vld [vmem:[%s2] sm:$0x3]
      %v1064 = vperm.slane %v1062, 0
      %v1065 = vperm.slane %v1062, 1
      %v1068 = vadd.f32 %v1060, %v1064
      %v1069 = vadd.f32 %v1061, %v1065
      %v1070 = vld [vmem:[#allocation3] sm:$0xf]
      %v1071 = vld [vmem:[#allocation3 + $0x4] sm:$0xf]
      %v1072 = vld [vmem:[#allocation3 + $0x8] sm:$0xf]
      %v1073 = vld [vmem:[#allocation3 + $0xc] sm:$0xf]
      %v1074 = vld [vmem:[#allocation3 + $0x10] sm:$0xf]
      %v1075 = vld [vmem:[#allocation3 + $0x14] sm:$0xf]
      %v1076 = vld [vmem:[#allocation3 + $0x18] sm:$0xf]
      %v1077 = vld [vmem:[#allocation3 + $0x1c] sm:$0xf]
      %v1078 = vld [vmem:[#allocation3 + $0x20] sm:$0xf]
      %v1079 = vld [vmem:[#allocation3 + $0x24] sm:$0xf]
      %v1080 = vld [vmem:[#allocation3 + $0x28] sm:$0xf]
      %v1081 = vld [vmem:[#allocation3 + $0x2c] sm:$0xf]
      %v1082 = vld [vmem:[#allocation3 + $0x30] sm:$0xf]
      %v1083 = vld [vmem:[#allocation3 + $0x34] sm:$0xf]
      %v1084 = vld [vmem:[#allocation3 + $0x38] sm:$0xf]
      %v1085 = vld [vmem:[#allocation3 + $0x3c] sm:$0xf]
      %v1086 = vld [vmem:[#allocation3 + $0x40] sm:$0xf]
      %v1087 = vld [vmem:[#allocation3 + $0x44] sm:$0xf]
      %v1088 = vld [vmem:[#allocation3 + $0x48] sm:$0xf]
      %v1089 = vld [vmem:[#allocation3 + $0x4c] sm:$0xf]
      %v1090 = vld [vmem:[#allocation3 + $0x50] sm:$0xf]
      %v1091 = vld [vmem:[#allocation3 + $0x54] sm:$0xf]
      %v1092 = vld [vmem:[#allocation3 + $0x58] sm:$0xf]
      %v1093 = vld [vmem:[#allocation3 + $0x5c] sm:$0xf]
      %v1094 = vld [vmem:[#allocation3 + $0x60] sm:$0xf]
      %v1095 = vld [vmem:[#allocation3 + $0x64] sm:$0xf]
      %v1096 = vld [vmem:[#allocation3 + $0x68] sm:$0xf]
      %v1097 = vld [vmem:[#allocation3 + $0x6c] sm:$0xf]
      %v1098 = vld [vmem:[#allocation3 + $0x70] sm:$0xf]
      %v1099 = vld [vmem:[#allocation3 + $0x74] sm:$0xf]
      %v1100 = vld [vmem:[#allocation3 + $0x78] sm:$0xf]
      %v1101 = vld [vmem:[#allocation3 + $0x7c] sm:$0xf]
      %v1102 = vld [vmem:[#allocation3 + $0x80] sm:$0xf]
      %v1103 = vld [vmem:[#allocation3 + $0x84] sm:$0xf]
      %v1104 = vld [vmem:[#allocation3 + $0x88] sm:$0xf]
      %v1105 = vld [vmem:[#allocation3 + $0x8c] sm:$0xf]
      %v1106 = vld [vmem:[#allocation3 + $0x90] sm:$0xf]
      %v1107 = vld [vmem:[#allocation3 + $0x94] sm:$0xf]
      %v1108 = vld [vmem:[#allocation3 + $0x98] sm:$0xf]
      %v1109 = vld [vmem:[#allocation3 + $0x9c] sm:$0xf]
      %v1110 = vld [vmem:[#allocation3 + $0xa0] sm:$0xf]
      %v1111 = vld [vmem:[#allocation3 + $0xa4] sm:$0xf]
      %v1112 = vld [vmem:[#allocation3 + $0xa8] sm:$0xf]
      %v1113 = vld [vmem:[#allocation3 + $0xac] sm:$0xf]
      %v1114 = vld [vmem:[#allocation3 + $0xb0] sm:$0xf]
      %v1115 = vld [vmem:[#allocation3 + $0xb4] sm:$0xf]
      %v1116 = vld [vmem:[#allocation3 + $0xb8] sm:$0xf]
      %v1117 = vld [vmem:[#allocation3 + $0xbc] sm:$0xf]
      %v1118 = vld [vmem:[#allocation3 + $0xc0] sm:$0xf]
      %v1119 = vld [vmem:[#allocation3 + $0xc4] sm:$0xf]
      %v1120 = vld [vmem:[#allocation3 + $0xc8] sm:$0xf]
      %v1121 = vld [vmem:[#allocation3 + $0xcc] sm:$0xf]
      %v1122 = vld [vmem:[#allocation3 + $0xd0] sm:$0xf]
      %v1123 = vld [vmem:[#allocation3 + $0xd4] sm:$0xf]
      %v1124 = vld [vmem:[#allocation3 + $0xd8] sm:$0xf]
      %v1125 = vld [vmem:[#allocation3 + $0xdc] sm:$0xf]
      %v1126 = vld [vmem:[#allocation3 + $0xe0] sm:$0xf]
      %v1127 = vld [vmem:[#allocation3 + $0xe4] sm:$0xf]
      %v1128 = vld [vmem:[#allocation3 + $0xe8] sm:$0xf]
      %v1129 = vld [vmem:[#allocation3 + $0xec] sm:$0xf]
      %v1130 = vld [vmem:[#allocation3 + $0xf0] sm:$0xf]
      %v1131 = vld [vmem:[#allocation3 + $0xf4] sm:$0xf]
      %v1132 = vld [vmem:[#allocation3 + $0xf8] sm:$0xf]
      %v1133 = vld [vmem:[#allocation3 + $0xfc] sm:$0xf]
      %v1134 = vld [vmem:[#allocation3 + $0x100] sm:$0xf]
      %v1135 = vld [vmem:[#allocation3 + $0x104] sm:$0xf]
      %v1136 = vld [vmem:[#allocation3 + $0x108] sm:$0xf]
      %v1137 = vld [vmem:[#allocation3 + $0x10c] sm:$0xf]
      %v1138 = vld [vmem:[#allocation3 + $0x110] sm:$0xf]
      %v1139 = vld [vmem:[#allocation3 + $0x114] sm:$0xf]
      %v1140 = vld [vmem:[#allocation3 + $0x118] sm:$0xf]
      %v1141 = vld [vmem:[#allocation3 + $0x11c] sm:$0xf]
      %v1142 = vld [vmem:[#allocation3 + $0x120] sm:$0xf]
      %v1143 = vld [vmem:[#allocation3 + $0x124] sm:$0xf]
      %v1144 = vld [vmem:[#allocation3 + $0x128] sm:$0xf]
      %v1145 = vld [vmem:[#allocation3 + $0x12c] sm:$0xf]
      %v1146 = vld [vmem:[#allocation3 + $0x130] sm:$0xf]
      %v1147 = vld [vmem:[#allocation3 + $0x134] sm:$0xf]
      %v1148 = vld [vmem:[#allocation3 + $0x138] sm:$0xf]
      %v1149 = vld [vmem:[#allocation3 + $0x13c] sm:$0xf]
      %v1150 = vld [vmem:[#allocation3 + $0x140] sm:$0xf]
      %v1151 = vld [vmem:[#allocation3 + $0x144] sm:$0xf]
      %v1152 = vld [vmem:[#allocation3 + $0x148] sm:$0xf]
      %v1153 = vld [vmem:[#allocation3 + $0x14c] sm:$0xf]
      %v1154 = vld [vmem:[#allocation3 + $0x150] sm:$0xf]
      %v1155 = vld [vmem:[#allocation3 + $0x154] sm:$0xf]
      %v1156 = vld [vmem:[#allocation3 + $0x158] sm:$0xf]
      %v1157 = vld [vmem:[#allocation3 + $0x15c] sm:$0xf]
      %v1158 = vld [vmem:[#allocation3 + $0x160] sm:$0xf]
      %v1159 = vld [vmem:[#allocation3 + $0x164] sm:$0xf]
      %v1160 = vld [vmem:[#allocation3 + $0x168] sm:$0xf]
      %v1161 = vld [vmem:[#allocation3 + $0x16c] sm:$0xf]
      %v1162 = vld [vmem:[#allocation3 + $0x170] sm:$0xf]
      %v1163 = vld [vmem:[#allocation3 + $0x174] sm:$0xf]
      %v1164 = vld [vmem:[#allocation3 + $0x178] sm:$0xf]
      %v1165 = vld [vmem:[#allocation3 + $0x17c] sm:$0xf]
      %v1166 = vld [vmem:[%s4] sm:$0xff]
      %v1167 = vld [vmem:[%s4 + $0x8] sm:$0xff]
      %v1168 = vpack.c.bf16 %v1068, %v1068
      %v1169 = vperm.slane %v1166, 0
      %v1186 = vunpack.c.l.b16 %v1070
      %v1187 = vunpack.c.l.b16 %v1071
      %v1188 = vunpack.c.l.b16 %v1072
      %v1189 = vunpack.c.l.b16 %v1073
      %v1190 = vunpack.c.l.b16 %v1074
      %v1191 = vunpack.c.l.b16 %v1075
      %v1192 = vunpack.c.l.b16 %v1076
      %v1193 = vunpack.c.l.b16 %v1077
      %v1194 = vunpack.c.l.b16 %v1078
      %v1195 = vunpack.c.l.b16 %v1079
      %v1196 = vunpack.c.l.b16 %v1080
      %v1197 = vunpack.c.l.b16 %v1081
      %v1198 = vunpack.c.l.b16 %v1082
      %v1199 = vunpack.c.l.b16 %v1083
      %v1200 = vunpack.c.l.b16 %v1084
      %v1201 = vunpack.c.l.b16 %v1085
      %v1202 = vpack.c.b16 %v1187, %v1186
      %v1203 = vpack.c.b16 %v1189, %v1188
      %v1204 = vpack.c.b16 %v1191, %v1190
      %v1205 = vpack.c.b16 %v1193, %v1192
      %v1206 = vpack.c.b16 %v1195, %v1194
      %v1207 = vpack.c.b16 %v1197, %v1196
      %v1208 = vpack.c.b16 %v1199, %v1198
      %v1209 = vpack.c.b16 %v1201, %v1200
      %1218 = vmatpush.bf16.msra.mxu0 %v1209
      %1219 = vmatpush.bf16.msra.mxu0 %v1208
      %1220 = vmatpush.bf16.msra.mxu0 %v1207
      %1221 = vmatpush.bf16.msra.mxu0 %v1206
      %1222 = vmatpush.bf16.msra.mxu0 %v1205
      %1223 = vmatpush.bf16.msra.mxu0 %v1204
      %1224 = vmatpush.bf16.msra.mxu0 %v1203
      %1225 = vmatpush.bf16.msra.mxu0 %v1202
      %1226 = vmatmul.bf16.gmra.mxu0 %v1168
      %v1227 = vpop.f32.mrf.mxu0
      %v1228 = vadd.f32 %v1169, %v1227
      %v1229 = vpop.f32.mrf.mxu0
      %1230 = vdwg.mxu0
      %v1231 = vrot.slane %v1228, 4
      %v1232 = vadd.f32 %v1228, %v1231
      %v1233 = vrot.slane %v1232, 2
      %v1234 = vadd.f32 %v1232, %v1233
      %v1235 = vrot.slane %v1234, 1
      %v1236 = vadd.f32 %v1234, %v1235
      %v1237 = vrcp.pop 8.0
      %v1238 = vmul.f32 8.0, %v1237
      %v1239 = vsub.f32 1.0, %v1238
      %v1240 = vmul.f32 %v1237, %v1239
      %v1241 = vadd.f32 %v1237, %v1240
      %vm1242 = vweird.f32 %v1237
      %v1243 = vsel %vm1242, %v1237, %v1241
      %v1244 = vmul.f32 %v1236, %v1243
      %v1245 = vsub.f32 %v1228, %v1244
      %v1246 = vmul.f32 %v1245, %v1245
      %v1247 = vrot.slane %v1246, 4
      %v1248 = vadd.f32 %v1246, %v1247
      %v1249 = vrot.slane %v1248, 2
      %v1250 = vadd.f32 %v1248, %v1249
      %v1251 = vrot.slane %v1250, 1
      %v1252 = vadd.f32 %v1250, %v1251
      %v1253 = vmul.f32 %v1252, %v1243
      %v1254 = vadd.f32 %v1253, 1e-05
      %v1255 = vrsqrt.pop %v1254
      %v1256 = vmul.f32 %v1255, %v1254
      %v1257 = vmul.f32 %v1256, %v1255
      %v1258 = vmul.f32 0.5, %v1257
      %v1259 = vsub.f32 1.5, %v1258
      %v1260 = vmul.f32 %v1255, %v1259
      %vm1261 = vweird.f32 %v1254
      %vm1262 = vweird.f32 %v1255
      %vm1263 = vmor %vm1261, %vm1262
      %v1264 = vsel %vm1263, %v1255, %v1260
      %v1265 = vmul.f32 %v1245, %v1264
      %v1266 = vperm.slane %v1166, 1
      %v1267 = vmul.f32 %v1265, %v1266
      %v1268 = vperm.slane %v1166, 2
      %v1269 = vadd.f32 %v1267, %v1268
      %v1270 = vmax.f32 %v1269, 0.0
      %v1271 = vpack.c.bf16 %v1270, %v1270
      %v1272 = vperm.slane %v1166, 3
      %v1289 = vunpack.c.l.b16 %v1086
      %v1290 = vunpack.c.l.b16 %v1087
      %v1291 = vunpack.c.l.b16 %v1088
      %v1292 = vunpack.c.l.b16 %v1089
      %v1293 = vunpack.c.l.b16 %v1090
      %v1294 = vunpack.c.l.b16 %v1091
      %v1295 = vunpack.c.l.b16 %v1092
      %v1296 = vunpack.c.l.b16 %v1093
      %v1297 = vunpack.c.l.b16 %v1094
      %v1298 = vunpack.c.l.b16 %v1095
      %v1299 = vunpack.c.l.b16 %v1096
      %v1300 = vunpack.c.l.b16 %v1097
      %v1301 = vunpack.c.l.b16 %v1098
      %v1302 = vunpack.c.l.b16 %v1099
      %v1303 = vunpack.c.l.b16 %v1100
      %v1304 = vunpack.c.l.b16 %v1101
      %v1305 = vpack.c.b16 %v1290, %v1289
      %v1306 = vpack.c.b16 %v1292, %v1291
      %v1307 = vpack.c.b16 %v1294, %v1293
      %v1308 = vpack.c.b16 %v1296, %v1295
      %v1309 = vpack.c.b16 %v1298, %v1297
      %v1310 = vpack.c.b16 %v1300, %v1299
      %v1311 = vpack.c.b16 %v1302, %v1301
      %v1312 = vpack.c.b16 %v1304, %v1303
      %1321 = vmatpush.bf16.msra.mxu0 %v1312
      %1322 = vmatpush.bf16.msra.mxu0 %v1311
      %1323 = vmatpush.bf16.msra.mxu0 %v1310
      %1324 = vmatpush.bf16.msra.mxu0 %v1309
      %1325 = vmatpush.bf16.msra.mxu0 %v1308
      %1326 = vmatpush.bf16.msra.mxu0 %v1307
      %1327 = vmatpush.bf16.msra.mxu0 %v1306
      %1328 = vmatpush.bf16.msra.mxu0 %v1305
      %1329 = vmatmul.bf16.gmra.mxu0 %v1271
      %v1330 = vpop.f32.mrf.mxu0
      %v1331 = vadd.f32 %v1272, %v1330
      %v1332 = vpop.f32.mrf.mxu0
      %1333 = vdwg.mxu0
      %v1334 = vpack.c.bf16 %v1331, %v1331
      %v1335 = vperm.slane %v1166, 4
      %v1352 = vunpack.c.l.b16 %v1102
      %v1353 = vunpack.c.l.b16 %v1103
      %v1354 = vunpack.c.l.b16 %v1104
      %v1355 = vunpack.c.l.b16 %v1105
      %v1356 = vunpack.c.l.b16 %v1106
      %v1357 = vunpack.c.l.b16 %v1107
      %v1358 = vunpack.c.l.b16 %v1108
      %v1359 = vunpack.c.l.b16 %v1109
      %v1360 = vunpack.c.l.b16 %v1110
      %v1361 = vunpack.c.l.b16 %v1111
      %v1362 = vunpack.c.l.b16 %v1112
      %v1363 = vunpack.c.l.b16 %v1113
      %v1364 = vunpack.c.l.b16 %v1114
      %v1365 = vunpack.c.l.b16 %v1115
      %v1366 = vunpack.c.l.b16 %v1116
      %v1367 = vunpack.c.l.b16 %v1117
      %v1368 = vpack.c.b16 %v1353, %v1352
      %v1369 = vpack.c.b16 %v1355, %v1354
      %v1370 = vpack.c.b16 %v1357, %v1356
      %v1371 = vpack.c.b16 %v1359, %v1358
      %v1372 = vpack.c.b16 %v1361, %v1360
      %v1373 = vpack.c.b16 %v1363, %v1362
      %v1374 = vpack.c.b16 %v1365, %v1364
      %v1375 = vpack.c.b16 %v1367, %v1366
      %1384 = vmatpush.bf16.msra.mxu0 %v1375
      %1385 = vmatpush.bf16.msra.mxu0 %v1374
      %1386 = vmatpush.bf16.msra.mxu0 %v1373
      %1387 = vmatpush.bf16.msra.mxu0 %v1372
      %1388 = vmatpush.bf16.msra.mxu0 %v1371
      %1389 = vmatpush.bf16.msra.mxu0 %v1370
      %1390 = vmatpush.bf16.msra.mxu0 %v1369
      %1391 = vmatpush.bf16.msra.mxu0 %v1368
      %1392 = vmatmul.bf16.gmra.mxu0 %v1334
      %v1393 = vpop.f32.mrf.mxu0
      %v1394 = vadd.f32 %v1335, %v1393
      %v1395 = vpop.f32.mrf.mxu0
      %1396 = vdwg.mxu0
      %v1397 = vrot.slane %v1394, 4
      %v1398 = vadd.f32 %v1394, %v1397
      %v1399 = vrot.slane %v1398, 2
      %v1400 = vadd.f32 %v1398, %v1399
      %v1401 = vrot.slane %v1400, 1
      %v1402 = vadd.f32 %v1400, %v1401
      %v1403 = vmul.f32 %v1402, %v1243
      %v1404 = vsub.f32 %v1394, %v1403
      %v1405 = vmul.f32 %v1404, %v1404
      %v1406 = vrot.slane %v1405, 4
      %v1407 = vadd.f32 %v1405, %v1406
      %v1408 = vrot.slane %v1407, 2
      %v1409 = vadd.f32 %v1407, %v1408
      %v1410 = vrot.slane %v1409, 1
      %v1411 = vadd.f32 %v1409, %v1410
      %v1412 = vmul.f32 %v1411, %v1243
      %v1413 = vadd.f32 %v1412, 1e-05
      %v1414 = vrsqrt.pop %v1413
      %v1415 = vmul.f32 %v1414, %v1413
      %v1416 = vmul.f32 %v1415, %v1414
      %v1417 = vmul.f32 0.5, %v1416
      %v1418 = vsub.f32 1.5, %v1417
      %v1419 = vmul.f32 %v1414, %v1418
      %vm1420 = vweird.f32 %v1413
      %vm1421 = vweird.f32 %v1414
      %vm1422 = vmor %vm1420, %vm1421
      %v1423 = vsel %vm1422, %v1414, %v1419
      %v1424 = vmul.f32 %v1404, %v1423
      %v1425 = vperm.slane %v1166, 5
      %v1426 = vmul.f32 %v1424, %v1425
      %v1427 = vperm.slane %v1166, 6
      %v1428 = vadd.f32 %v1426, %v1427
      %v1429 = vmax.f32 %v1428, 0.0
      %v1430 = vpack.c.bf16 %v1429, %v1429
      %v1431 = vperm.slane %v1166, 7
      %v1448 = vunpack.c.l.b16 %v1118
      %v1449 = vunpack.c.l.b16 %v1119
      %v1450 = vunpack.c.l.b16 %v1120
      %v1451 = vunpack.c.l.b16 %v1121
      %v1452 = vunpack.c.l.b16 %v1122
      %v1453 = vunpack.c.l.b16 %v1123
      %v1454 = vunpack.c.l.b16 %v1124
      %v1455 = vunpack.c.l.b16 %v1125
      %v1456 = vunpack.c.l.b16 %v1126
      %v1457 = vunpack.c.l.b16 %v1127
      %v1458 = vunpack.c.l.b16 %v1128
      %v1459 = vunpack.c.l.b16 %v1129
      %v1460 = vunpack.c.l.b16 %v1130
      %v1461 = vunpack.c.l.b16 %v1131
      %v1462 = vunpack.c.l.b16 %v1132
      %v1463 = vunpack.c.l.b16 %v1133
      %v1464 = vpack.c.b16 %v1449, %v1448
      %v1465 = vpack.c.b16 %v1451, %v1450
      %v1466 = vpack.c.b16 %v1453, %v1452
      %v1467 = vpack.c.b16 %v1455, %v1454
      %v1468 = vpack.c.b16 %v1457, %v1456
      %v1469 = vpack.c.b16 %v1459, %v1458
      %v1470 = vpack.c.b16 %v1461, %v1460
      %v1471 = vpack.c.b16 %v1463, %v1462
      %1480 = vmatpush.bf16.msra.mxu0 %v1471
      %1481 = vmatpush.bf16.msra.mxu0 %v1470
      %1482 = vmatpush.bf16.msra.mxu0 %v1469
      %1483 = vmatpush.bf16.msra.mxu0 %v1468
      %1484 = vmatpush.bf16.msra.mxu0 %v1467
      %1485 = vmatpush.bf16.msra.mxu0 %v1466
      %1486 = vmatpush.bf16.msra.mxu0 %v1465
      %1487 = vmatpush.bf16.msra.mxu0 %v1464
      %1488 = vmatmul.bf16.gmra.mxu0 %v1430
      %v1489 = vpop.f32.mrf.mxu0
      %v1490 = vadd.f32 %v1431, %v1489
      %v1491 = vpop.f32.mrf.mxu0
      %1492 = vdwg.mxu0
      %v1493 = vpack.c.bf16 %v1069, %v1069
      %v1494 = vperm.slane %v1167, 0
      %v1511 = vunpack.c.l.b16 %v1134
      %v1512 = vunpack.c.l.b16 %v1135
      %v1513 = vunpack.c.l.b16 %v1136
      %v1514 = vunpack.c.l.b16 %v1137
      %v1515 = vunpack.c.l.b16 %v1138
      %v1516 = vunpack.c.l.b16 %v1139
      %v1517 = vunpack.c.l.b16 %v1140
      %v1518 = vunpack.c.l.b16 %v1141
      %v1519 = vunpack.c.l.b16 %v1142
      %v1520 = vunpack.c.l.b16 %v1143
      %v1521 = vunpack.c.l.b16 %v1144
      %v1522 = vunpack.c.l.b16 %v1145
      %v1523 = vunpack.c.l.b16 %v1146
      %v1524 = vunpack.c.l.b16 %v1147
      %v1525 = vunpack.c.l.b16 %v1148
      %v1526 = vunpack.c.l.b16 %v1149
      %v1527 = vpack.c.b16 %v1512, %v1511
      %v1528 = vpack.c.b16 %v1514, %v1513
      %v1529 = vpack.c.b16 %v1516, %v1515
      %v1530 = vpack.c.b16 %v1518, %v1517
      %v1531 = vpack.c.b16 %v1520, %v1519
      %v1532 = vpack.c.b16 %v1522, %v1521
      %v1533 = vpack.c.b16 %v1524, %v1523
      %v1534 = vpack.c.b16 %v1526, %v1525
      %1543 = vmatpush.bf16.msra.mxu0 %v1534
      %1544 = vmatpush.bf16.msra.mxu0 %v1533
      %1545 = vmatpush.bf16.msra.mxu0 %v1532
      %1546 = vmatpush.bf16.msra.mxu0 %v1531
      %1547 = vmatpush.bf16.msra.mxu0 %v1530
      %1548 = vmatpush.bf16.msra.mxu0 %v1529
      %1549 = vmatpush.bf16.msra.mxu0 %v1528
      %1550 = vmatpush.bf16.msra.mxu0 %v1527
      %1551 = vmatmul.bf16.gmra.mxu0 %v1493
      %v1552 = vpop.f32.mrf.mxu0
      %v1553 = vadd.f32 %v1494, %v1552
      %v1554 = vpop.f32.mrf.mxu0
      %1555 = vdwg.mxu0
      %v1556 = vrot.slane %v1553, 4
      %v1557 = vadd.f32 %v1553, %v1556
      %v1558 = vrot.slane %v1557, 2
      %v1559 = vadd.f32 %v1557, %v1558
      %v1560 = vrot.slane %v1559, 1
      %v1561 = vadd.f32 %v1559, %v1560
      %v1562 = vmul.f32 %v1561, %v1243
      %v1563 = vsub.f32 %v1553, %v1562
      %v1564 = vmul.f32 %v1563, %v1563
      %v1565 = vrot.slane %v1564, 4
      %v1566 = vadd.f32 %v1564, %v1565
      %v1567 = vrot.slane %v1566, 2
      %v1568 = vadd.f32 %v1566, %v1567
      %v1569 = vrot.slane %v1568, 1
      %v1570 = vadd.f32 %v1568, %v1569
      %v1571 = vmul.f32 %v1570, %v1243
      %v1572 = vadd.f32 %v1571, 1e-05
      %v1573 = vrsqrt.pop %v1572
      %v1574 = vmul.f32 %v1573, %v1572
      %v1575 = vmul.f32 %v1574, %v1573
      %v1576 = vmul.f32 0.5, %v1575
      %v1577 = vsub.f32 1.5, %v1576
      %v1578 = vmul.f32 %v1573, %v1577
      %vm1579 = vweird.f32 %v1572
      %vm1580 = vweird.f32 %v1573
      %vm1581 = vmor %vm1579, %vm1580
      %v1582 = vsel %vm1581, %v1573, %v1578
      %v1583 = vmul.f32 %v1563, %v1582
      %v1584 = vperm.slane %v1167, 1
      %v1585 = vmul.f32 %v1583, %v1584
      %v1586 = vperm.slane %v1167, 2
      %v1587 = vadd.f32 %v1585, %v1586
      %v1588 = vmax.f32 %v1587, 0.0
      %v1589 = vpack.c.bf16 %v1588, %v1588
      %v1590 = vperm.slane %v1167, 3
      %v1607 = vunpack.c.l.b16 %v1150
      %v1608 = vunpack.c.l.b16 %v1151
      %v1609 = vunpack.c.l.b16 %v1152
      %v1610 = vunpack.c.l.b16 %v1153
      %v1611 = vunpack.c.l.b16 %v1154
      %v1612 = vunpack.c.l.b16 %v1155
      %v1613 = vunpack.c.l.b16 %v1156
      %v1614 = vunpack.c.l.b16 %v1157
      %v1615 = vunpack.c.l.b16 %v1158
      %v1616 = vunpack.c.l.b16 %v1159
      %v1617 = vunpack.c.l.b16 %v1160
      %v1618 = vunpack.c.l.b16 %v1161
      %v1619 = vunpack.c.l.b16 %v1162
      %v1620 = vunpack.c.l.b16 %v1163
      %v1621 = vunpack.c.l.b16 %v1164
      %v1622 = vunpack.c.l.b16 %v1165
      %v1623 = vpack.c.b16 %v1608, %v1607
      %v1624 = vpack.c.b16 %v1610, %v1609
      %v1625 = vpack.c.b16 %v1612, %v1611
      %v1626 = vpack.c.b16 %v1614, %v1613
      %v1627 = vpack.c.b16 %v1616, %v1615
      %v1628 = vpack.c.b16 %v1618, %v1617
      %v1629 = vpack.c.b16 %v1620, %v1619
      %v1630 = vpack.c.b16 %v1622, %v1621
      %1639 = vmatpush.bf16.msra.mxu0 %v1630
      %1640 = vmatpush.bf16.msra.mxu0 %v1629
      %1641 = vmatpush.bf16.msra.mxu0 %v1628
      %1642 = vmatpush.bf16.msra.mxu0 %v1627
      %1643 = vmatpush.bf16.msra.mxu0 %v1626
      %1644 = vmatpush.bf16.msra.mxu0 %v1625
      %1645 = vmatpush.bf16.msra.mxu0 %v1624
      %1646 = vmatpush.bf16.msra.mxu0 %v1623
      %1647 = vmatmul.bf16.gmra.mxu0 %v1589
      %v1648 = vpop.f32.mrf.mxu0
      %v1649 = vadd.f32 %v1590, %v1648
      %v1650 = vpop.f32.mrf.mxu0
      %1651 = vdwg.mxu0
      %v1652 = vmul.f32 %v1490, %v1490
      %1653 = vadd.xlane.f32.xlu0 %v1652
      %v1654 = vpop.xlane.xlu0 %1653
      %v1655 = vmax.f32 %v1654, 1e-24
      %v1656 = vrsqrt.pop %v1655
      %v1657 = vmul.f32 %v1656, %v1655
      %v1658 = vmul.f32 %v1657, %v1656
      %v1659 = vmul.f32 0.5, %v1658
      %v1660 = vsub.f32 1.5, %v1659
      %v1661 = vmul.f32 %v1656, %v1660
      %vm1662 = vweird.f32 %v1655
      %vm1663 = vweird.f32 %v1656
      %vm1664 = vmor %vm1662, %vm1663
      %v1665 = vsel %vm1664, %v1656, %v1661
      %v1666 = vmul.f32 %v1490, %v1665
      %v1667 = vmul.f32 %v1649, %v1649
      %1668 = vadd.xlane.f32.xlu0 %v1667
      %v1669 = vpop.xlane.xlu0 %1668
      %v1670 = vmax.f32 %v1669, 1e-24
      %v1671 = vrsqrt.pop %v1670
      %v1672 = vmul.f32 %v1671, %v1670
      %v1673 = vmul.f32 %v1672, %v1671
      %v1674 = vmul.f32 0.5, %v1673
      %v1675 = vsub.f32 1.5, %v1674
      %v1676 = vmul.f32 %v1671, %v1675
      %vm1677 = vweird.f32 %v1670
      %vm1678 = vweird.f32 %v1671
      %vm1679 = vmor %vm1677, %vm1678
      %v1680 = vsel %vm1679, %v1671, %v1676
      %v1681 = vmul.f32 %v1649, %v1680
      %v1682 = vrot.slane %v1681, 4
      %v1683 = vmul.f32 %v1666, %v1682
      %1684 = vadd.xlane.f32.xlu0 %v1683
      %v1685 = vpop.xlane.xlu0 %1684
      %v1686 = vmul.f32 %v1685, 2.0
      %v1687 = vsub.f32 2.0, %v1686
      %vm1688 = vcmask 7168
      %v1689 = vsel %vm1688, %v1687, 0.0
      %1690 = vadd.xlane.f32.xlu0 %v1689
      %v1691 = vpop.xlane.xlu0 %1690
      %v1692 = vrot.slane %v1691, 4
      %v1693 = vadd.f32 %v1691, %v1692
      %v1694 = vrot.slane %v1693, 2
      %v1695 = vadd.f32 %v1693, %v1694
      %v1696 = vrot.slane %v1695, 1
      %v1697 = vadd.f32 %v1695, %v1696
      %s1698 = vtos %v1697
      %v1699 = vrcp.pop 4.0
      %v1700 = vmul.f32 4.0, %v1699
      %v1701 = vsub.f32 1.0, %v1700
      %v1702 = vmul.f32 %v1699, %v1701
      %v1703 = vadd.f32 %v1699, %v1702
      %vm1704 = vweird.f32 %v1699
      %v1705 = vsel %vm1704, %v1699, %v1703
      %s1706 = vtos %v1705
      %s1707 = smul.f32 %s1698, %s1706
      %s1708 = scalar_lea.smem [#allocation6], 0
      %1709 = sst [smem:[%s1708]] %s1707
    $region33: #{byol_forward.1} parent=1 // pred_fallthru
      _
    // Predicated region
    $region34: #{byol_forward.1} parent=1 // pred_check
      _
    $region35: #{byol_forward.1} parent=1 // pred_check_branch
      %1711 = sbr.rel (0) target = $region37
    $region36: #{byol_forward.1} parent=1 // pred_region
      %1713 = vsyncadd [#allocation5], 0
      %s1715 = sshll.u32 %s5, 4
      %s1716 = int_to_ptr.hbm [resolvable:$true] %s1715
      %1718 = dma.smem_to_hbm [#allocation6], 16, %s1716, [#allocation5]
    $region37: #{byol_forward.1} parent=1 // pred_fallthru
      _
    // Predicated region
    $region38: #{byol_forward.1} parent=1 // pred_check
      _
    $region39: #{byol_forward.1} parent=1 // pred_check_branch
      %1720 = sbr.rel (0) target = $region41
    $region40: #{byol_forward.1} parent=1 // pred_region
      %1722 = dma.done [#allocation5], 16
    $region41: #{byol_forward.1} parent=1 // pred_fallthru
      _
    %1723 = sfence
    %1724 = vsyncpa [#allocation4], 1
    %1725 = vsyncpa [#allocation5], 1

</llo_original>
